<compile_context>
chip_gen: v7x
topology: tpu7x:2x2x1
jax: 0.10.0
libtpu: 0.0.40
codegen_flags: <defaults>
</compile_context>

<pallas_src>
import jax
import jax.numpy as jnp
from jax.experimental import pallas as pl
from jax.experimental.pallas import tpu as pltpu


def _round_up(x, m):
    return (x + m - 1) // m * m


def _choose_tile(n, tile_n):
    """Pick (tile, n_pad): tile is a multiple of 128 that minimises pad waste,
    keeps >= 2 grid steps when possible (v7x has 2 TensorCores)."""
    n128 = _round_up(max(n, 1), 128)
    units = n128 // 128
    max_units = max(1, min(max(tile_n // 128, 1),
                           (units + 1) // 2 if units >= 2 else 1))
    best_u, best_total = 1, None
    for u in range(max_units, 0, -1):          # prefer larger tiles on ties
        total = _round_up(units, u)
        if best_total is None or total < best_total:
            best_total, best_u = total, u
    return best_u * 128, best_total * 128


def _make_kernel(gc, num_chunks, width, out_dim, inv_g):
    def kernel(xaug_ref, mu_aug_ref, fw0t_ref, w1t_ref, w2t_ref, out_ref, acc_ref):
        xaug = xaug_ref[...]                                        # [D+2, TN] f32

        acc_ref[...] = jnp.zeros_like(acc_ref)

        @pl.loop(0, num_chunks)
        def _(c):
            start = pl.multiple_of(c * gc, gc)
            mu_c = mu_aug_ref[pl.ds(start, gc), :]                  # [GC, D+2] f32
            # f32 logits matmul (exponent accuracy), EUP exp2, bf16 weights for MXU.
            logits = jnp.dot(mu_c, xaug, preferred_element_type=jnp.float32)
            w = jnp.exp2(logits).astype(jnp.bfloat16)               # [GC, TN]
            fw_c = fw0t_ref[:, pl.ds(start, gc)]                    # [W+1, GC] bf16
            acc_ref[...] += jnp.dot(fw_c, w, preferred_element_type=jnp.float32)

        blend = acc_ref[...]                                        # [W+1, TN] f32
        wsum = blend[width:width + 1, :]                            # [1, TN]
        inv_wsum = pl.reciprocal(wsum + 1e-8, approx=True)

        # enc @ W0 == (w @ FW0) * inv_wsum (scalar normalisation commutes).
        h = jnp.maximum(blend[:width, :] * inv_wsum, 0.0)           # [W, TN]
        h = jnp.maximum(jnp.dot(w1t_ref[...], h,
                                preferred_element_type=jnp.float32), 0.0)
        out = jnp.dot(w2t_ref[...], h,
                      preferred_element_type=jnp.float32)           # [OUT, TN]
        gmm = wsum * inv_g                                          # [1, TN]

        # Single fused lane-dense store: rows [0:OUT) = mlp output, row OUT = gmm.
        out_ref[...] = jnp.concatenate([out, gmm], axis=0)
    return kernel


def network_with_splash_encoding(coords, means, stds, feats, w0, w1, w2,
                                 *, tile_n=1024):
    n, d = coords.shape
    g, f = feats.shape
    width = w0.shape[1]
    out_dim = w2.shape[1]

    f32 = jnp.float32
    coords = coords.astype(f32)
    means = means.astype(f32)
    stds = stds.astype(f32)
    feats = feats.astype(f32)
    w0 = w0.astype(f32)
    w1 = w1.astype(f32)
    w2 = w2.astype(f32)

    # ---- N tiling (lane axis): minimise pad waste, keep >=2 grid steps ----
    tile, n_pad = _choose_tile(n, tile_n)
    grid = (n_pad // tile,)

    # ---- Gaussian-axis chunking (bounds [Gc, TN] intermediates in VMEM) ----
    gc = min(256, _round_up(g, 128))
    g_pad = _round_up(g, gc)
    num_chunks = g_pad // gc

    # ---- O(G)/O(N) precompute (layout plumbing; O(N*G) stays in-kernel) ----
    log2e = 1.4426950408889634                      # exp(x) == exp2(log2e * x)
    s_col = log2e / (2.0 * stds.reshape(g, 1) ** 2)                 # [G, 1]
    mu2 = jnp.sum(means * means, axis=-1, keepdims=True)            # [G, 1]
    mu_aug = jnp.concatenate(
        [2.0 * s_col * means, -s_col, -s_col * mu2], axis=-1)       # [G, D+2]
    if g_pad > g:
        # Padded Gaussians: constant term -1e4 -> exp2(-1e4) == 0 -> no contribution.
        pad_rows = jnp.concatenate(
            [jnp.zeros((g_pad - g, d + 1), f32),
             jnp.full((g_pad - g, 1), -1e4, f32)], axis=-1)
        mu_aug = jnp.concatenate([mu_aug, pad_rows], axis=0)        # [Gpad, D+2]

    fw0 = feats @ w0                                                # [G, W]
    fw0_aug = jnp.concatenate([fw0, jnp.ones((g, 1), f32)], axis=-1)
    if g_pad > g:
        fw0_aug = jnp.concatenate(
            [fw0_aug, jnp.zeros((g_pad - g, width + 1), f32)], axis=0)
    fw0_aug_t = fw0_aug.T.astype(jnp.bfloat16)                      # [W+1, Gpad] bf16
    w1t = w1.T                                                      # [W, W]   f32
    w2t = w2.T                                                      # [OUT, W] f32

    x_t = coords.T                                                  # [D, N]
    x2 = jnp.sum(x_t * x_t, axis=0, keepdims=True)                  # [1, N]
    x_aug = jnp.concatenate([x_t, x2, jnp.ones_like(x2)], axis=0)   # [D+2, N]
    x_aug = jnp.pad(x_aug, ((0, 0), (0, n_pad - n)))                # [D+2, Npad]

    kernel = _make_kernel(gc, num_chunks, width, out_dim, 1.0 / float(g))
    full = lambda i: (0, 0)

    # TODO(synk): mark the resident parameter specs Buffered(1) for very large G
    #             to halve their VMEM footprint (kept default-buffered here).
    comb = pl.pallas_call(
        kernel,
        out_shape=jax.ShapeDtypeStruct((out_dim + 1, n_pad), jnp.float32),
        grid_spec=pltpu.PrefetchScalarGridSpec(
            num_scalar_prefetch=0,
            grid=grid,
            in_specs=[
                pl.BlockSpec((d + 2, tile), lambda i: (0, i)),   # augmented coords
                pl.BlockSpec((g_pad, d + 2), full),              # MU_aug   (resident)
                pl.BlockSpec((width + 1, g_pad), full),          # [FW0|1]^T bf16 (resident)
                pl.BlockSpec((width, width), full),              # W1^T
                pl.BlockSpec((out_dim, width), full),            # W2^T
            ],
            out_specs=pl.BlockSpec((out_dim + 1, tile), lambda i: (0, i)),
            scratch_shapes=[pltpu.VMEM((width + 1, tile), jnp.float32)],
        ),
        compiler_params=pltpu.CompilerParams(
            dimension_semantics=("parallel",),
            vmem_limit_bytes=32 * 1024 * 1024),
    )(x_aug, mu_aug, fw0_aug_t, w1t, w2t)

    out = comb[:out_dim, :n].T                                      # [N, OUT]
    gmm = comb[out_dim:, :n].T                                      # [N, 1]
    return out, gmm


def _reference(coords, means, stds, feats, w0, w1, w2):
    d2 = jnp.sum((coords[:, None, :] - means[None, :, :]) ** 2, axis=-1)
    w = jnp.exp(-d2 / (2.0 * stds[0][None, :] ** 2))
    wsum = jnp.sum(w, axis=-1, keepdims=True)
    gmm = wsum / means.shape[0]
    enc = (w @ feats) / (wsum + 1e-8)
    h = jnp.maximum(enc @ w0, 0.0)
    h = jnp.maximum(h @ w1, 0.0)
    return h @ w2, gmm


if __name__ == "__main__":
    # Small, module-consistent shapes (N not a power-of-two tile multiple).
    N = 1920           # number of query coordinates
    D = 3              # coordinate dim
    F = 3              # n_features_per_gauss  -> MLP input dim
    G = 256            # n_gausses (small synthetic)
    WIDTH = 64         # net_width
    OUT = 3            # output_dim
    STD_INIT_FACTOR = 1.0

    key = jax.random.PRNGKey(0)
    k_c, k_m, k_f, k_w0, k_w1, k_w2 = jax.random.split(key, 6)

    coords = jax.random.uniform(k_c, (N, D), dtype=jnp.float32)
    means = jax.random.uniform(k_m, (G, D), dtype=jnp.float32)
    stds = jnp.full((1, G), 0.1 * STD_INIT_FACTOR, dtype=jnp.float32)
    feats = 0.1 * jax.random.normal(k_f, (G, F), dtype=jnp.float32)
    w0 = jax.random.normal(k_w0, (F, WIDTH), dtype=jnp.float32) * (1.0 / F) ** 0.5
    w1 = jax.random.normal(k_w1, (WIDTH, WIDTH), dtype=jnp.float32) * (1.0 / WIDTH) ** 0.5
    w2 = jax.random.normal(k_w2, (WIDTH, OUT), dtype=jnp.float32) * (1.0 / WIDTH) ** 0.5

    out, gmm = network_with_splash_encoding(coords, means, stds, feats,
                                            w0, w1, w2, tile_n=1024)
    jax.block_until_ready((out, gmm))

    ref_out, ref_gmm = _reference(coords, means, stds, feats, w0, w1, w2)
    assert out.shape == (N, OUT) and gmm.shape == (N, 1)
    assert jnp.allclose(out, ref_out, rtol=1e-3, atol=1e-3)
    assert jnp.allclose(gmm, ref_gmm, rtol=1e-3, atol=1e-3)
    print("KERNEL_OK")
</pallas_src>

<mosaic_0001>
module attributes {stable_mosaic.version = 11 : i64} {
  func.func @kernel(%arg0: i32, %arg1: memref<5x640xf32, #tpu.memory_space<vmem>>, %arg2: memref<256x5xf32, #tpu.memory_space<vmem>>, %arg3: memref<65x256xbf16, #tpu.memory_space<vmem>>, %arg4: memref<64x64xf32, #tpu.memory_space<vmem>>, %arg5: memref<3x64xf32, #tpu.memory_space<vmem>>, %arg6: memref<4x640xf32, #tpu.memory_space<vmem>>, %arg7: memref<65x640xf32, #tpu.memory_space<vmem>>) attributes {dimension_semantics = [#tpu.dimension_semantics<parallel>], iteration_bounds = array<i64: 3>, scalar_prefetch = 0 : i64, scratch_operands = 1 : i64, tpu.core_type = #tpu.core_type<tc>, window_params = [{transform_indices = @transform_0, window_bounds = array<i64: 5, 640>}, {pipeline_mode = #tpu.pipeline_mode<synchronous>, transform_indices = @transform_1, window_bounds = array<i64: 256, 5>}, {pipeline_mode = #tpu.pipeline_mode<synchronous>, transform_indices = @transform_2, window_bounds = array<i64: 65, 256>}, {pipeline_mode = #tpu.pipeline_mode<synchronous>, transform_indices = @transform_3, window_bounds = array<i64: 64, 64>}, {pipeline_mode = #tpu.pipeline_mode<synchronous>, transform_indices = @transform_4, window_bounds = array<i64: 3, 64>}, {transform_indices = @transform_5, window_bounds = array<i64: 4, 640>}]} {
    %c0 = arith.constant 0 : index
    %c0_0 = arith.constant 0 : index
    %0 = vector.load %arg1[%c0, %c0_0] : memref<5x640xf32, #tpu.memory_space<vmem>>, vector<5x640xf32>
    %cst = arith.constant 0.000000e+00 : f32
    %1 = vector.broadcast %cst : f32 to vector<65x640xf32>
    %c0_1 = arith.constant 0 : index
    %c0_2 = arith.constant 0 : index
    %2 = vector.load %arg7[%c0_1, %c0_2] : memref<65x640xf32, #tpu.memory_space<vmem>>, vector<65x640xf32>
    tpu.vector_store %arg7[%c0_1, %c0_2], %1 {strides = array<i32>} : memref<65x640xf32, #tpu.memory_space<vmem>>, vector<65x640xf32>,
    %c0_i32 = arith.constant 0 : i32
    %c1_i32 = arith.constant 1 : i32
    %3 = arith.muli %c0_i32, %c1_i32 : i32
    %c0_i32_3 = arith.constant 0 : i32
    %4 = arith.addi %c0_i32_3, %3 : i32
    %c256_i32 = arith.constant 256 : i32
    %5 = arith.muli %4, %c256_i32 : i32
    %6 = tpu.assume_multiple %5, 256 : i32
    %7 = arith.index_cast %6 : i32 to index
    %c0_4 = arith.constant 0 : index
    %8 = vector.load %arg2[%7, %c0_4] : memref<256x5xf32, #tpu.memory_space<vmem>>, vector<256x5xf32>
    %cst_5 = arith.constant dense<0.000000e+00> : vector<256x640xf32>
    %9 = tpu.matmul %8, %0, %cst_5 {dimension_numbers = #tpu.dot_dimension_numbers<[1], [0], [0], [1], [0, 0, 1, 1], [], []>} : vector<256x5xf32>, vector<5x640xf32>, vector<256x640xf32> -> vector<256x640xf32>
    %10 = math.exp2 %9 : vector<256x640xf32>
    %11 = arith.truncf %10 : vector<256x640xf32> to vector<256x640xbf16>
    %c0_6 = arith.constant 0 : index
    %12 = arith.index_cast %6 : i32 to index
    %13 = vector.load %arg3[%c0_6, %12] : memref<65x256xbf16, #tpu.memory_space<vmem>>, vector<65x256xbf16>
    %c0_7 = arith.constant 0 : index
    %c0_8 = arith.constant 0 : index
    %14 = vector.load %arg7[%c0_7, %c0_8] : memref<65x640xf32, #tpu.memory_space<vmem>>, vector<65x640xf32>
    %cst_9 = arith.constant dense<0.000000e+00> : vector<65x640xf32>
    %15 = tpu.matmul %13, %11, %cst_9 {dimension_numbers = #tpu.dot_dimension_numbers<[1], [0], [0], [1], [0, 0, 1, 1], [], []>} : vector<65x256xbf16>, vector<256x640xbf16>, vector<65x640xf32> -> vector<65x640xf32>
    %16 = arith.addf %14, %15 : vector<65x640xf32>
    %c0_10 = arith.constant 0 : index
    %c0_11 = arith.constant 0 : index
    %17 = vector.load %arg7[%c0_10, %c0_11] : memref<65x640xf32, #tpu.memory_space<vmem>>, vector<65x640xf32>
    tpu.vector_store %arg7[%c0_10, %c0_11], %16 {strides = array<i32>} : memref<65x640xf32, #tpu.memory_space<vmem>>, vector<65x640xf32>,
    %c1_i32_12 = arith.constant 1 : i32
    %c0_13 = arith.constant 0 : index
    %c0_14 = arith.constant 0 : index
    %18 = vector.load %arg7[%c0_13, %c0_14] : memref<65x640xf32, #tpu.memory_space<vmem>>, vector<65x640xf32>
    %19 = vector.extract_strided_slice %18 {offsets = [64, 0], sizes = [1, 640], strides = [1, 1]} : vector<65x640xf32> to vector<1x640xf32>
    %cst_15 = arith.constant 9.99999993E-9 : f32
    %20 = vector.broadcast %cst_15 : f32 to vector<1x640xf32>
    %21 = arith.addf %19, %20 : vector<1x640xf32>
    %22 = tpu.reciprocal %21 {approx = true} : vector<1x640xf32> -> vector<1x640xf32>
    %23 = vector.extract_strided_slice %18 {offsets = [0, 0], sizes = [64, 640], strides = [1, 1]} : vector<65x640xf32> to vector<64x640xf32>
    %24 = vector.broadcast %22 : vector<1x640xf32> to vector<64x640xf32>
    %25 = arith.mulf %23, %24 : vector<64x640xf32>
    %cst_16 = arith.constant 0.000000e+00 : f32
    %26 = vector.broadcast %cst_16 : f32 to vector<64x640xf32>
    %27 = arith.maximumf %25, %26 : vector<64x640xf32>
    %c0_17 = arith.constant 0 : index
    %c0_18 = arith.constant 0 : index
    %28 = vector.load %arg4[%c0_17, %c0_18] : memref<64x64xf32, #tpu.memory_space<vmem>>, vector<64x64xf32>
    %cst_19 = arith.constant dense<0.000000e+00> : vector<64x640xf32>
    %29 = tpu.matmul %28, %27, %cst_19 {dimension_numbers = #tpu.dot_dimension_numbers<[1], [0], [0], [1], [0, 0, 1, 1], [], []>} : vector<64x64xf32>, vector<64x640xf32>, vector<64x640xf32> -> vector<64x640xf32>
    %cst_20 = arith.constant 0.000000e+00 : f32
    %30 = vector.broadcast %cst_20 : f32 to vector<64x640xf32>
    %31 = arith.maximumf %29, %30 : vector<64x640xf32>
    %c0_21 = arith.constant 0 : index
    %c0_22 = arith.constant 0 : index
    %32 = vector.load %arg5[%c0_21, %c0_22] : memref<3x64xf32, #tpu.memory_space<vmem>>, vector<3x64xf32>
    %cst_23 = arith.constant dense<0.000000e+00> : vector<3x640xf32>
    %33 = tpu.matmul %32, %31, %cst_23 {dimension_numbers = #tpu.dot_dimension_numbers<[1], [0], [0], [1], [0, 0, 1, 1], [], []>} : vector<3x64xf32>, vector<64x640xf32>, vector<3x640xf32> -> vector<3x640xf32>
    %cst_24 = arith.constant 3.906250e-03 : f32
    %34 = vector.broadcast %cst_24 : f32 to vector<1x640xf32>
    %35 = arith.mulf %19, %34 : vector<1x640xf32>
    %36 = tpu.concatenate %33, %35 in 0 : vector<3x640xf32>, vector<1x640xf32> -> vector<4x640xf32>
    %c0_25 = arith.constant 0 : index
    %c0_26 = arith.constant 0 : index
    %37 = vector.load %arg6[%c0_25, %c0_26] : memref<4x640xf32, #tpu.memory_space<vmem>>, vector<4x640xf32>
    tpu.vector_store %arg6[%c0_25, %c0_26], %36 {strides = array<i32>} : memref<4x640xf32, #tpu.memory_space<vmem>>, vector<4x640xf32>,
    return
  }
  func.func @transform_0(%arg0: i32) -> (i32, i32) {
    %c0_i32 = arith.constant 0 : i32
    %c0_i32_0 = arith.constant 0 : i32
    return %c0_i32, %arg0 : i32, i32
  }
  func.func @transform_1(%arg0: i32) -> (i32, i32) {
    %c0_i32 = arith.constant 0 : i32
    %c0_i32_0 = arith.constant 0 : i32
    %c0_i32_1 = arith.constant 0 : i32
    return %c0_i32, %c0_i32_0 : i32, i32
  }
  func.func @transform_2(%arg0: i32) -> (i32, i32) {
    %c0_i32 = arith.constant 0 : i32
    %c0_i32_0 = arith.constant 0 : i32
    %c0_i32_1 = arith.constant 0 : i32
    return %c0_i32, %c0_i32_0 : i32, i32
  }
  func.func @transform_3(%arg0: i32) -> (i32, i32) {
    %c0_i32 = arith.constant 0 : i32
    %c0_i32_0 = arith.constant 0 : i32
    %c0_i32_1 = arith.constant 0 : i32
    return %c0_i32, %c0_i32_0 : i32, i32
  }
  func.func @transform_4(%arg0: i32) -> (i32, i32) {
    %c0_i32 = arith.constant 0 : i32
    %c0_i32_0 = arith.constant 0 : i32
    %c0_i32_1 = arith.constant 0 : i32
    return %c0_i32, %c0_i32_0 : i32, i32
  }
  func.func @transform_5(%arg0: i32) -> (i32, i32) {
    %c0_i32 = arith.constant 0 : i32
    %c0_i32_0 = arith.constant 0 : i32
    return %c0_i32, %arg0 : i32, i32
  }
}

</mosaic_0001>

<llo_original>
// kernel: tpu_custom_call.1
$region0: #{tpu_custom_call.1}
  #allocation0 [shape = 'u32[]', space=smem, size = 0x4, offset = 0x4, fixed_abs, tag = 'smem constant byte address 0x4 - core index']
  #allocation1 [shape = 'u32[144,128]{1,0:T(1,128)}', space=vmem, size = 0x12000, scoped, tag = 'internal scratch']
  #allocation2 [shape = 'f32[65,640]{1,0:T(8,128)}', space=vmem, size = 0x2d000, scoped, tag = 'scratch operand']
  %s0 = inlined_call_operand.vmem [shape: f32[5,1920], index: 0, kind: input, shape index: {}]
  %s1 = inlined_call_operand.vmem [shape: f32[256,5], index: 1, kind: input, shape index: {}]
  %s2 = inlined_call_operand.vmem [shape: bf16[65,256], index: 2, kind: input, shape index: {}]
  %s3 = inlined_call_operand.vmem [shape: f32[64,64], index: 3, kind: input, shape index: {}]
  %s4 = inlined_call_operand.vmem [shape: f32[3,64], index: 4, kind: input, shape index: {}]
  %s5 = inlined_call_operand.hbm [shape: f32[4,1920], index: 5, kind: output, shape index: {}]
  %s6 = sld [smem:[#allocation0]]
  $region53: #{tpu_custom_call.1} parent=0
    _
  %s8 = ssub.s32 1, %s6
  %s9 = scalar_select 0, %s8, %s6
  $region1: #{tpu_custom_call.1} parent=0
    #allocation3 [shape = 'u8[20480]{0}', space=vmem, size = 0x5000, scoped, tag = 'output window, operand 0']
    #allocation4 [shape = 's32[2]{0}', space=sflag, size = 0x8, scoped, tag = 'scoped memory for tpu_custom_call.1']
    %10 = vsyncpa [#allocation4], 0
    %s11 = scalar_lea.sflag [#allocation4], 1
    %12 = vsyncpa %s11, 0
    loop: start=0, step=1, limit=5
    $region2: #{tpu_custom_call.1} parent=1 // loop_pre_header
      _
    $region3: #{tpu_custom_call.1} parent=1 // loop_header
      %s14 = sphi 0, %s18
      %p15 = scmp.ge.s32.totalorder %s14, 5
      %s24 = sphi 0, %s26
      %s27 = sphi 0, %s24
      %s28 = sphi 0, %s27
      %s44 = sphi 0, %s28
      %s48 = sphi 0, %s48
      %s50 = sphi 0, %s48
      %s51 = sphi 0, %s50
      %s65 = sphi 0, %s51
      %s69 = sphi 0, %s69
      %s71 = sphi 0, %s69
      %s72 = sphi 0, %s71
      %s86 = sphi 0, %s72
      %s90 = sphi 0, %s90
      %s92 = sphi 0, %s90
      %s93 = sphi 0, %s92
      %s107 = sphi 0, %s93
      %s111 = sphi 0, %s111
      %s113 = sphi 0, %s111
      %s114 = sphi 0, %s113
      %s128 = sphi 0, %s114
      %s134 = sphi 0, %s136
      %s137 = sphi 0, %s134
      %s138 = sphi 0, %s137
      %s154 = sphi 0, %s138
    $region4: #{tpu_custom_call.1} parent=1 // loop_header_branch
      %17 = sbr.rel (%p15) target = $region8
    $region5: #{tpu_custom_call.1} parent=1 // loop_body
      %s19 = ssub.s32 %s14, 1
      %s20 = ssub.s32 %s14, 2
      %s21 = sadd.s32 %s14, 1
      %s22 = ssub.s32 %s14, %s21
      %p23 = scmp.eq.s32.totalorder %s22, 0
      %s25 = sadd.s32 %s24, 1
      %s26 = scalar_select %p23, %s24, %s25
      %p29 = pneg %p23
      %p30 = scmp.eq.s32.totalorder %s14, 2
      %p31 = por %p29, %p30
      %p32 = scmp.ne.s32.totalorder %s24, %s27
      %p33 = scmp.eq.s32.totalorder %s14, 0
      %p34 = por %p32, %p33
      %p35 = scmp.ne.s32.totalorder %s24, %s27
      %p36 = scmp.eq.s32.totalorder %s19, 2
      %p37 = por %p35, %p36
      %p38 = scmp.ne.s32.totalorder %s27, %s28
      %p39 = scmp.eq.s32.totalorder %s19, 0
      %p40 = por %p38, %p39
      %p41 = scmp.ne.s32.totalorder %s27, %s28
      %p42 = scmp.eq.s32.totalorder %s20, 2
      %p43 = por %p41, %p42
      %p45 = scmp.ne.s32.totalorder %s28, %s44
      %p46 = scmp.eq.s32.totalorder %s20, 0
      %p47 = por %p45, %p46
      %s49 = sadd.s32 %s48, 1
      %p52 = scmp.eq.s32.totalorder %s14, 2
      %p53 = scmp.ne.s32.totalorder %s48, %s50
      %p54 = scmp.eq.s32.totalorder %s14, 0
      %p55 = por %p53, %p54
      %p56 = scmp.ne.s32.totalorder %s48, %s50
      %p57 = scmp.eq.s32.totalorder %s19, 2
      %p58 = por %p56, %p57
      %p59 = scmp.ne.s32.totalorder %s50, %s51
      %p60 = scmp.eq.s32.totalorder %s19, 0
      %p61 = por %p59, %p60
      %p62 = scmp.ne.s32.totalorder %s50, %s51
      %p63 = scmp.eq.s32.totalorder %s20, 2
      %p64 = por %p62, %p63
      %p66 = scmp.ne.s32.totalorder %s51, %s65
      %p67 = scmp.eq.s32.totalorder %s20, 0
      %p68 = por %p66, %p67
      %s70 = sadd.s32 %s69, 1
      %p73 = scmp.eq.s32.totalorder %s14, 2
      %p74 = scmp.ne.s32.totalorder %s69, %s71
      %p75 = scmp.eq.s32.totalorder %s14, 0
      %p76 = por %p74, %p75
      %p77 = scmp.ne.s32.totalorder %s69, %s71
      %p78 = scmp.eq.s32.totalorder %s19, 2
      %p79 = por %p77, %p78
      %p80 = scmp.ne.s32.totalorder %s71, %s72
      %p81 = scmp.eq.s32.totalorder %s19, 0
      %p82 = por %p80, %p81
      %p83 = scmp.ne.s32.totalorder %s71, %s72
      %p84 = scmp.eq.s32.totalorder %s20, 2
      %p85 = por %p83, %p84
      %p87 = scmp.ne.s32.totalorder %s72, %s86
      %p88 = scmp.eq.s32.totalorder %s20, 0
      %p89 = por %p87, %p88
      %s91 = sadd.s32 %s90, 1
      %p94 = scmp.eq.s32.totalorder %s14, 2
      %p95 = scmp.ne.s32.totalorder %s90, %s92
      %p96 = scmp.eq.s32.totalorder %s14, 0
      %p97 = por %p95, %p96
      %p98 = scmp.ne.s32.totalorder %s90, %s92
      %p99 = scmp.eq.s32.totalorder %s19, 2
      %p100 = por %p98, %p99
      %p101 = scmp.ne.s32.totalorder %s92, %s93
      %p102 = scmp.eq.s32.totalorder %s19, 0
      %p103 = por %p101, %p102
      %p104 = scmp.ne.s32.totalorder %s92, %s93
      %p105 = scmp.eq.s32.totalorder %s20, 2
      %p106 = por %p104, %p105
      %p108 = scmp.ne.s32.totalorder %s93, %s107
      %p109 = scmp.eq.s32.totalorder %s20, 0
      %p110 = por %p108, %p109
      %s112 = sadd.s32 %s111, 1
      %p115 = scmp.eq.s32.totalorder %s14, 2
      %p116 = scmp.ne.s32.totalorder %s111, %s113
      %p117 = scmp.eq.s32.totalorder %s14, 0
      %p118 = por %p116, %p117
      %p119 = scmp.ne.s32.totalorder %s111, %s113
      %p120 = scmp.eq.s32.totalorder %s19, 2
      %p121 = por %p119, %p120
      %p122 = scmp.ne.s32.totalorder %s113, %s114
      %p123 = scmp.eq.s32.totalorder %s19, 0
      %p124 = por %p122, %p123
      %p125 = scmp.ne.s32.totalorder %s113, %s114
      %p126 = scmp.eq.s32.totalorder %s20, 2
      %p127 = por %p125, %p126
      %p129 = scmp.ne.s32.totalorder %s114, %s128
      %p130 = scmp.eq.s32.totalorder %s20, 0
      %p131 = por %p129, %p130
      %s132 = ssub.s32 %s14, %s21
      %p133 = scmp.eq.s32.totalorder %s132, 0
      %s135 = sadd.s32 %s134, 1
      %s136 = scalar_select %p133, %s134, %s135
      %p139 = pneg %p133
      %p140 = scmp.eq.s32.totalorder %s14, 2
      %p141 = por %p139, %p140
      %p142 = scmp.ne.s32.totalorder %s134, %s137
      %p143 = scmp.eq.s32.totalorder %s14, 0
      %p144 = por %p142, %p143
      %p145 = scmp.ne.s32.totalorder %s134, %s137
      %p146 = scmp.eq.s32.totalorder %s19, 2
      %p147 = por %p145, %p146
      %p148 = scmp.ne.s32.totalorder %s137, %s138
      %p149 = scmp.eq.s32.totalorder %s19, 0
      %p150 = por %p148, %p149
      %p151 = scmp.ne.s32.totalorder %s137, %s138
      %p152 = scmp.eq.s32.totalorder %s20, 2
      %p153 = por %p151, %p152
      %p155 = scmp.ne.s32.totalorder %s138, %s154
      %p156 = scmp.eq.s32.totalorder %s20, 0
      %p157 = por %p155, %p156
      %p158 = scmp.le.s32.totalorder 1, %s14
      %p159 = scmp.lt.s32.totalorder %s14, 4
      %p160 = pnand %p158, %p159
      %p161 = pneg %p160
      // Predicated region
      $region9: #{tpu_custom_call.1} parent=5 // pred_check
        _
      $region10: #{tpu_custom_call.1} parent=5 // pred_check_branch
        %163 = sbr.rel (%p160) target = $region12
      $region11: #{tpu_custom_call.1} parent=5 // pred_region
        %s164 = ssub.s32 %s14, 1
        // Predicated region
        $region13: #{tpu_custom_call.1} parent=11 // pred_check
          %p165 = pneg %p61
        $region14: #{tpu_custom_call.1} parent=11 // pred_check_branch
          %167 = sbr.rel (%p165) target = $region16
        $region15: #{tpu_custom_call.1} parent=11 // pred_region
          _
        $region16: #{tpu_custom_call.1} parent=11 // pred_fallthru
          _
        // Predicated region
        $region17: #{tpu_custom_call.1} parent=11 // pred_check
          %p168 = pneg %p82
        $region18: #{tpu_custom_call.1} parent=11 // pred_check_branch
          %170 = sbr.rel (%p168) target = $region20
        $region19: #{tpu_custom_call.1} parent=11 // pred_region
          _
        $region20: #{tpu_custom_call.1} parent=11 // pred_fallthru
          _
        // Predicated region
        $region21: #{tpu_custom_call.1} parent=11 // pred_check
          %p171 = pneg %p103
        $region22: #{tpu_custom_call.1} parent=11 // pred_check_branch
          %173 = sbr.rel (%p171) target = $region24
        $region23: #{tpu_custom_call.1} parent=11 // pred_region
          _
        $region24: #{tpu_custom_call.1} parent=11 // pred_fallthru
          _
        // Predicated region
        $region25: #{tpu_custom_call.1} parent=11 // pred_check
          %p174 = pneg %p124
        $region26: #{tpu_custom_call.1} parent=11 // pred_check_branch
          %176 = sbr.rel (%p174) target = $region28
        $region27: #{tpu_custom_call.1} parent=11 // pred_region
          _
        $region28: #{tpu_custom_call.1} parent=11 // pred_fallthru
          _
      $region12: #{tpu_custom_call.1} parent=5 // pred_fallthru
        _
      %p177 = scmp.lt.s32.totalorder %s14, 3
      // Predicated region
      $region29: #{tpu_custom_call.1} parent=5 // pred_check
        %p178 = pneg %p177
      $region30: #{tpu_custom_call.1} parent=5 // pred_check_branch
        %180 = sbr.rel (%p178) target = $region32
      $region31: #{tpu_custom_call.1} parent=5 // pred_region
        // Predicated region
        $region33: #{tpu_custom_call.1} parent=31 // pred_check
          %p181 = pneg %p34
        $region34: #{tpu_custom_call.1} parent=31 // pred_check_branch
          %183 = sbr.rel (%p181) target = $region36
        $region35: #{tpu_custom_call.1} parent=31 // pred_region
          %s184 = smul.u32 5, %s14
          %p185 = scmp.lt.s32.totalorder %s184, 14
          %s186 = scalar_select %p185, %s184, 14
          %s187 = smul.addr %s186, 8
          %s188 = scalar_lea.vmem %s0, %s187
          %s189 = smul.u32 5, %s14
        $region36: #{tpu_custom_call.1} parent=31 // pred_fallthru
          _
      $region32: #{tpu_custom_call.1} parent=5 // pred_fallthru
        _
      %p190 = scmp.le.s32.totalorder 1, %s14
      %p191 = scmp.lt.s32.totalorder %s14, 4
      %p192 = pnand %p190, %p191
      %p193 = pneg %p192
      // Predicated region
      $region37: #{tpu_custom_call.1} parent=5 // pred_check
        _
      $region38: #{tpu_custom_call.1} parent=5 // pred_check_branch
        %195 = sbr.rel (%p192) target = $region40
      $region39: #{tpu_custom_call.1} parent=5 // pred_region
        %s196 = ssub.s32 %s14, 1
        %s197 = smul.u32 5, %s19
        %p198 = scmp.lt.s32.totalorder %s197, 14
        %s199 = scalar_select %p198, %s197, 14
        %s200 = smul.addr %s199, 8
        %s201 = scalar_lea.vmem %s0, %s200
        %p202 = pneg %p40
        %p203 = pneg %p37
        %p204 = pneg %p61
        %p205 = pneg %p58
        %p206 = pneg %p82
        %p207 = pneg %p79
        %p208 = pneg %p103
        %p209 = pneg %p100
        %p210 = pneg %p124
        %p211 = pneg %p121
        %p212 = pneg %p150
        %p213 = pneg %p147
        %s214 = sand.u32 %s137, 1
        %s215 = scalar_lea.sflag [#allocation4], %s214
        %s216 = sand.u32 %s137, 1
        %s217 = smul.addr %s216, 20
        %s218 = scalar_lea.vmem [#allocation3], %s217
        %s219 = smul.u32 5, %s19
        %p220 = scmp.lt.s32.totalorder %s219, 14
        %s221 = scalar_select %p220, %s219, 14
        %s222 = smul.addr %s221, 8
        %s223 = scalar_lea.vmem %s0, %s222
        %s224 = smul.u32 5, %s19
        %s225 = smul.u32 5, %s19
        %v227 = vld [vmem:[%s223] sm:$0x1f]
        %v228 = vld [vmem:[%s223 + $0x8] sm:$0x1f]
        %v229 = vld [vmem:[%s223 + $0x10] sm:$0x1f]
        %v230 = vld [vmem:[%s223 + $0x18] sm:$0x1f]
        %v231 = vld [vmem:[%s223 + $0x20] sm:$0x1f]
        %232 = vst [vmem:[#allocation2] sm:$0xff] 0.0
        %233 = vst [vmem:[#allocation2 + $0x8] sm:$0xff] 0.0
        %234 = vst [vmem:[#allocation2 + $0x10] sm:$0xff] 0.0
        %235 = vst [vmem:[#allocation2 + $0x18] sm:$0xff] 0.0
        %236 = vst [vmem:[#allocation2 + $0x20] sm:$0xff] 0.0
        %237 = vst [vmem:[#allocation2 + $0x28] sm:$0xff] 0.0
        %238 = vst [vmem:[#allocation2 + $0x30] sm:$0xff] 0.0
        %239 = vst [vmem:[#allocation2 + $0x38] sm:$0xff] 0.0
        %240 = vst [vmem:[#allocation2 + $0x40] sm:$0xff] 0.0
        %241 = vst [vmem:[#allocation2 + $0x48] sm:$0xff] 0.0
        %242 = vst [vmem:[#allocation2 + $0x50] sm:$0xff] 0.0
        %243 = vst [vmem:[#allocation2 + $0x58] sm:$0xff] 0.0
        %244 = vst [vmem:[#allocation2 + $0x60] sm:$0xff] 0.0
        %245 = vst [vmem:[#allocation2 + $0x68] sm:$0xff] 0.0
        %246 = vst [vmem:[#allocation2 + $0x70] sm:$0xff] 0.0
        %247 = vst [vmem:[#allocation2 + $0x78] sm:$0xff] 0.0
        %248 = vst [vmem:[#allocation2 + $0x80] sm:$0xff] 0.0
        %249 = vst [vmem:[#allocation2 + $0x88] sm:$0xff] 0.0
        %250 = vst [vmem:[#allocation2 + $0x90] sm:$0xff] 0.0
        %251 = vst [vmem:[#allocation2 + $0x98] sm:$0xff] 0.0
        %252 = vst [vmem:[#allocation2 + $0xa0] sm:$0xff] 0.0
        %253 = vst [vmem:[#allocation2 + $0xa8] sm:$0xff] 0.0
        %254 = vst [vmem:[#allocation2 + $0xb0] sm:$0xff] 0.0
        %255 = vst [vmem:[#allocation2 + $0xb8] sm:$0xff] 0.0
        %256 = vst [vmem:[#allocation2 + $0xc0] sm:$0xff] 0.0
        %257 = vst [vmem:[#allocation2 + $0xc8] sm:$0xff] 0.0
        %258 = vst [vmem:[#allocation2 + $0xd0] sm:$0xff] 0.0
        %259 = vst [vmem:[#allocation2 + $0xd8] sm:$0xff] 0.0
        %260 = vst [vmem:[#allocation2 + $0xe0] sm:$0xff] 0.0
        %261 = vst [vmem:[#allocation2 + $0xe8] sm:$0xff] 0.0
        %262 = vst [vmem:[#allocation2 + $0xf0] sm:$0xff] 0.0
        %263 = vst [vmem:[#allocation2 + $0xf8] sm:$0xff] 0.0
        %264 = vst [vmem:[#allocation2 + $0x100] sm:$0xff] 0.0
        %265 = vst [vmem:[#allocation2 + $0x108] sm:$0xff] 0.0
        %266 = vst [vmem:[#allocation2 + $0x110] sm:$0xff] 0.0
        %267 = vst [vmem:[#allocation2 + $0x118] sm:$0xff] 0.0
        %268 = vst [vmem:[#allocation2 + $0x120] sm:$0xff] 0.0
        %269 = vst [vmem:[#allocation2 + $0x128] sm:$0xff] 0.0
        %270 = vst [vmem:[#allocation2 + $0x130] sm:$0xff] 0.0
        %271 = vst [vmem:[#allocation2 + $0x138] sm:$0xff] 0.0
        %272 = vst [vmem:[#allocation2 + $0x140] sm:$0x1] 0.0
        %273 = vst [vmem:[#allocation2 + $0x148] sm:$0x1] 0.0
        %274 = vst [vmem:[#allocation2 + $0x150] sm:$0x1] 0.0
        %275 = vst [vmem:[#allocation2 + $0x158] sm:$0x1] 0.0
        %276 = vst [vmem:[#allocation2 + $0x160] sm:$0x1] 0.0
        %v277 = vld [vmem:[%s1] sm:$0xff]
        %v278 = vld [vmem:[%s1 + $0x8] sm:$0xff]
        %v279 = vld [vmem:[%s1 + $0x10] sm:$0xff]
        %v280 = vld [vmem:[%s1 + $0x18] sm:$0xff]
        %v281 = vld [vmem:[%s1 + $0x20] sm:$0xff]
        %v282 = vld [vmem:[%s1 + $0x28] sm:$0xff]
        %v283 = vld [vmem:[%s1 + $0x30] sm:$0xff]
        %v284 = vld [vmem:[%s1 + $0x38] sm:$0xff]
        %v285 = vld [vmem:[%s1 + $0x40] sm:$0xff]
        %v286 = vld [vmem:[%s1 + $0x48] sm:$0xff]
        %v287 = vld [vmem:[%s1 + $0x50] sm:$0xff]
        %v288 = vld [vmem:[%s1 + $0x58] sm:$0xff]
        %v289 = vld [vmem:[%s1 + $0x60] sm:$0xff]
        %v290 = vld [vmem:[%s1 + $0x68] sm:$0xff]
        %v291 = vld [vmem:[%s1 + $0x70] sm:$0xff]
        %v292 = vld [vmem:[%s1 + $0x78] sm:$0xff]
        %v293 = vld [vmem:[%s1 + $0x80] sm:$0xff]
        %v294 = vld [vmem:[%s1 + $0x88] sm:$0xff]
        %v295 = vld [vmem:[%s1 + $0x90] sm:$0xff]
        %v296 = vld [vmem:[%s1 + $0x98] sm:$0xff]
        %v297 = vld [vmem:[%s1 + $0xa0] sm:$0xff]
        %v298 = vld [vmem:[%s1 + $0xa8] sm:$0xff]
        %v299 = vld [vmem:[%s1 + $0xb0] sm:$0xff]
        %v300 = vld [vmem:[%s1 + $0xb8] sm:$0xff]
        %v301 = vld [vmem:[%s1 + $0xc0] sm:$0xff]
        %v302 = vld [vmem:[%s1 + $0xc8] sm:$0xff]
        %v303 = vld [vmem:[%s1 + $0xd0] sm:$0xff]
        %v304 = vld [vmem:[%s1 + $0xd8] sm:$0xff]
        %v305 = vld [vmem:[%s1 + $0xe0] sm:$0xff]
        %v306 = vld [vmem:[%s1 + $0xe8] sm:$0xff]
        %v307 = vld [vmem:[%s1 + $0xf0] sm:$0xff]
        %v308 = vld [vmem:[%s1 + $0xf8] sm:$0xff]
        %vm309 = vcmask 39936
        %v311 = vsel %vm309, %v277, 0
        %v314 = vsel %vm309, %v278, 0
        %v317 = vsel %vm309, %v279, 0
        %v320 = vsel %vm309, %v280, 0
        %v323 = vsel %vm309, %v281, 0
        %v326 = vsel %vm309, %v282, 0
        %v329 = vsel %vm309, %v283, 0
        %v332 = vsel %vm309, %v284, 0
        %v335 = vsel %vm309, %v285, 0
        %v338 = vsel %vm309, %v286, 0
        %v341 = vsel %vm309, %v287, 0
        %v344 = vsel %vm309, %v288, 0
        %v347 = vsel %vm309, %v289, 0
        %v350 = vsel %vm309, %v290, 0
        %v353 = vsel %vm309, %v291, 0
        %v356 = vsel %vm309, %v292, 0
        %v359 = vsel %vm309, %v293, 0
        %v362 = vsel %vm309, %v294, 0
        %v365 = vsel %vm309, %v295, 0
        %v368 = vsel %vm309, %v296, 0
        %v371 = vsel %vm309, %v297, 0
        %v374 = vsel %vm309, %v298, 0
        %v377 = vsel %vm309, %v299, 0
        %v380 = vsel %vm309, %v300, 0
        %v383 = vsel %vm309, %v301, 0
        %v386 = vsel %vm309, %v302, 0
        %v389 = vsel %vm309, %v303, 0
        %v392 = vsel %vm309, %v304, 0
        %v395 = vsel %vm309, %v305, 0
        %v398 = vsel %vm309, %v306, 0
        %v401 = vsel %vm309, %v307, 0
        %v404 = vsel %vm309, %v308, 0
        %vm406 = vcmask 1044480
        %v408 = vsel %vm406, %v227, 0
        %v411 = vsel %vm406, %v228, 0
        %v414 = vsel %vm406, %v229, 0
        %v417 = vsel %vm406, %v230, 0
        %v420 = vsel %vm406, %v231, 0
        %422 = vmatprep.subr.mxu0 %v411
        %423 = vmatpush1.msra.mxu0 %v408
        %424 = vmatprep.subr.mxu0 0.0
        %425 = vmatpush1.msra.mxu0 0.0
        %426 = vmatprep.subr.mxu0 0.0
        %427 = vmatpush1.msra.mxu0 0.0
        %428 = vmatprep.subr.mxu0 0.0
        %429 = vmatpush1.msra.mxu0 0.0
        %430 = vmatprep.subr.mxu0 0.0
        %431 = vmatpush1.msra.mxu0 0.0
        %432 = vmatprep.subr.mxu0 0.0
        %433 = vmatpush1.msra.mxu0 0.0
        %434 = vmatprep.subr.mxu0 0.0
        %435 = vmatpush1.msra.mxu0 0.0
        %436 = vmatprep.subr.mxu0 0.0
        %437 = vmatpush1.msra.mxu0 0.0
        %438 = vmatprep.subr.mxu0 0.0
        %439 = vmatpush1.msra.mxu0 0.0
        %440 = vmatprep.subr.mxu0 0.0
        %441 = vmatpush1.msra.mxu0 0.0
        %442 = vmatprep.subr.mxu0 0.0
        %443 = vmatpush1.msra.mxu0 0.0
        %444 = vmatprep.subr.mxu0 0.0
        %445 = vmatpush1.msra.mxu0 0.0
        %446 = vmatprep.subr.mxu0 0.0
        %447 = vmatpush1.msra.mxu0 0.0
        %448 = vmatprep.subr.mxu0 0.0
        %449 = vmatpush1.msra.mxu0 0.0
        %450 = vmatprep.subr.mxu0 0.0
        %451 = vmatpush1.msra.mxu0 0.0
        %452 = vmatprep.subr.mxu0 0.0
        %453 = vmatpush1.msra.mxu0 0.0
        %454 = vmatprep.subr.mxu0 0.0
        %455 = vmatpush1.msra.mxu0 0.0
        %456 = vmatprep.subr.mxu0 0.0
        %457 = vmatpush1.msra.mxu0 0.0
        %458 = vmatprep.subr.mxu0 0.0
        %459 = vmatpush1.msra.mxu0 0.0
        %460 = vmatprep.subr.mxu0 0.0
        %461 = vmatpush1.msra.mxu0 0.0
        %462 = vmatprep.subr.mxu0 0.0
        %463 = vmatpush1.msra.mxu0 0.0
        %464 = vmatprep.subr.mxu0 0.0
        %465 = vmatpush1.msra.mxu0 0.0
        %466 = vmatprep.subr.mxu0 0.0
        %467 = vmatpush1.msra.mxu0 0.0
        %468 = vmatprep.subr.mxu0 0.0
        %469 = vmatpush1.msra.mxu0 0.0
        %470 = vmatprep.subr.mxu0 0.0
        %471 = vmatpush1.msra.mxu0 0.0
        %472 = vmatprep.subr.mxu0 0.0
        %473 = vmatpush1.msra.mxu0 0.0
        %474 = vmatprep.subr.mxu0 0.0
        %475 = vmatpush1.msra.mxu0 0.0
        %476 = vmatprep.subr.mxu0 0.0
        %477 = vmatpush1.msra.mxu0 0.0
        %478 = vmatprep.subr.mxu0 0.0
        %479 = vmatpush1.msra.mxu0 0.0
        %480 = vmatprep.subr.mxu0 0.0
        %481 = vmatpush1.msra.mxu0 0.0
        %482 = vmatprep.subr.mxu0 0.0
        %483 = vmatpush1.msra.mxu0 0.0
        %484 = vmatprep.subr.mxu0 0.0
        %485 = vmatpush1.msra.mxu0 0.0
        %486 = vmatprep.mubr.f32.mxu0 0.0
        %487 = vmatmul.mubr.f32.gmra.mrb[0].mxu0 %v311
        %v488 = vpop.f32.mrb[0].mxu0
        %v489 = vadd.f32 0.0, %v488
        %v490 = vpop.f32.mrb[0].mxu0
        %v491 = vadd.f32 0.0, %v490
        %492 = vmatprep.mubr.f32.mxu0 0.0
        %493 = vmatmul.mubr.f32.gmra.mrb[0].mxu0 %v314
        %v494 = vpop.f32.mrb[0].mxu0
        %v495 = vadd.f32 0.0, %v494
        %v496 = vpop.f32.mrb[0].mxu0
        %v497 = vadd.f32 0.0, %v496
        %498 = vmatprep.mubr.f32.mxu0 0.0
        %499 = vmatmul.mubr.f32.gmra.mrb[0].mxu0 %v317
        %v500 = vpop.f32.mrb[0].mxu0
        %v501 = vadd.f32 0.0, %v500
        %v502 = vpop.f32.mrb[0].mxu0
        %v503 = vadd.f32 0.0, %v502
        %504 = vmatprep.mubr.f32.mxu0 0.0
        %505 = vmatmul.mubr.f32.gmra.mrb[0].mxu0 %v320
        %v506 = vpop.f32.mrb[0].mxu0
        %v507 = vadd.f32 0.0, %v506
        %v508 = vpop.f32.mrb[0].mxu0
        %v509 = vadd.f32 0.0, %v508
        %510 = vmatprep.mubr.f32.mxu0 0.0
        %511 = vmatmul.mubr.f32.gmra.mrb[0].mxu0 %v323
        %v512 = vpop.f32.mrb[0].mxu0
        %v513 = vadd.f32 0.0, %v512
        %v514 = vpop.f32.mrb[0].mxu0
        %v515 = vadd.f32 0.0, %v514
        %516 = vmatprep.mubr.f32.mxu0 0.0
        %517 = vmatmul.mubr.f32.gmra.mrb[0].mxu0 %v326
        %v518 = vpop.f32.mrb[0].mxu0
        %v519 = vadd.f32 0.0, %v518
        %v520 = vpop.f32.mrb[0].mxu0
        %v521 = vadd.f32 0.0, %v520
        %522 = vmatprep.mubr.f32.mxu0 0.0
        %523 = vmatmul.mubr.f32.gmra.mrb[0].mxu0 %v329
        %v524 = vpop.f32.mrb[0].mxu0
        %v525 = vadd.f32 0.0, %v524
        %v526 = vpop.f32.mrb[0].mxu0
        %v527 = vadd.f32 0.0, %v526
        %528 = vmatprep.mubr.f32.mxu0 0.0
        %529 = vmatmul.mubr.f32.gmra.mrb[0].mxu0 %v332
        %v530 = vpop.f32.mrb[0].mxu0
        %v531 = vadd.f32 0.0, %v530
        %v532 = vpop.f32.mrb[0].mxu0
        %v533 = vadd.f32 0.0, %v532
        %534 = vmatprep.mubr.f32.mxu0 0.0
        %535 = vmatmul.mubr.f32.gmra.mrb[0].mxu0 %v335
        %v536 = vpop.f32.mrb[0].mxu0
        %v537 = vadd.f32 0.0, %v536
        %v538 = vpop.f32.mrb[0].mxu0
        %v539 = vadd.f32 0.0, %v538
        %540 = vmatprep.mubr.f32.mxu0 0.0
        %541 = vmatmul.mubr.f32.gmra.mrb[0].mxu0 %v338
        %v542 = vpop.f32.mrb[0].mxu0
        %v543 = vadd.f32 0.0, %v542
        %v544 = vpop.f32.mrb[0].mxu0
        %v545 = vadd.f32 0.0, %v544
        %546 = vmatprep.mubr.f32.mxu0 0.0
        %547 = vmatmul.mubr.f32.gmra.mrb[0].mxu0 %v341
        %v548 = vpop.f32.mrb[0].mxu0
        %v549 = vadd.f32 0.0, %v548
        %v550 = vpop.f32.mrb[0].mxu0
        %v551 = vadd.f32 0.0, %v550
        %552 = vmatprep.mubr.f32.mxu0 0.0
        %553 = vmatmul.mubr.f32.gmra.mrb[0].mxu0 %v344
        %v554 = vpop.f32.mrb[0].mxu0
        %v555 = vadd.f32 0.0, %v554
        %v556 = vpop.f32.mrb[0].mxu0
        %v557 = vadd.f32 0.0, %v556
        %558 = vmatprep.mubr.f32.mxu0 0.0
        %559 = vmatmul.mubr.f32.gmra.mrb[0].mxu0 %v347
        %v560 = vpop.f32.mrb[0].mxu0
        %v561 = vadd.f32 0.0, %v560
        %v562 = vpop.f32.mrb[0].mxu0
        %v563 = vadd.f32 0.0, %v562
        %564 = vmatprep.mubr.f32.mxu0 0.0
        %565 = vmatmul.mubr.f32.gmra.mrb[0].mxu0 %v350
        %v566 = vpop.f32.mrb[0].mxu0
        %v567 = vadd.f32 0.0, %v566
        %v568 = vpop.f32.mrb[0].mxu0
        %v569 = vadd.f32 0.0, %v568
        %570 = vmatprep.mubr.f32.mxu0 0.0
        %571 = vmatmul.mubr.f32.gmra.mrb[0].mxu0 %v353
        %v572 = vpop.f32.mrb[0].mxu0
        %v573 = vadd.f32 0.0, %v572
        %v574 = vpop.f32.mrb[0].mxu0
        %v575 = vadd.f32 0.0, %v574
        %576 = vmatprep.mubr.f32.mxu0 0.0
        %577 = vmatmul.mubr.f32.gmra.mrb[0].mxu0 %v356
        %v578 = vpop.f32.mrb[0].mxu0
        %v579 = vadd.f32 0.0, %v578
        %v580 = vpop.f32.mrb[0].mxu0
        %v581 = vadd.f32 0.0, %v580
        %582 = vmatprep.mubr.f32.mxu0 0.0
        %583 = vmatmul.mubr.f32.gmra.mrb[0].mxu0 %v359
        %v584 = vpop.f32.mrb[0].mxu0
        %v585 = vadd.f32 0.0, %v584
        %v586 = vpop.f32.mrb[0].mxu0
        %v587 = vadd.f32 0.0, %v586
        %588 = vmatprep.mubr.f32.mxu0 0.0
        %589 = vmatmul.mubr.f32.gmra.mrb[0].mxu0 %v362
        %v590 = vpop.f32.mrb[0].mxu0
        %v591 = vadd.f32 0.0, %v590
        %v592 = vpop.f32.mrb[0].mxu0
        %v593 = vadd.f32 0.0, %v592
        %594 = vmatprep.mubr.f32.mxu0 0.0
        %595 = vmatmul.mubr.f32.gmra.mrb[0].mxu0 %v365
        %v596 = vpop.f32.mrb[0].mxu0
        %v597 = vadd.f32 0.0, %v596
        %v598 = vpop.f32.mrb[0].mxu0
        %v599 = vadd.f32 0.0, %v598
        %600 = vmatprep.mubr.f32.mxu0 0.0
        %601 = vmatmul.mubr.f32.gmra.mrb[0].mxu0 %v368
        %v602 = vpop.f32.mrb[0].mxu0
        %v603 = vadd.f32 0.0, %v602
        %v604 = vpop.f32.mrb[0].mxu0
        %v605 = vadd.f32 0.0, %v604
        %606 = vmatprep.mubr.f32.mxu0 0.0
        %607 = vmatmul.mubr.f32.gmra.mrb[0].mxu0 %v371
        %v608 = vpop.f32.mrb[0].mxu0
        %v609 = vadd.f32 0.0, %v608
        %v610 = vpop.f32.mrb[0].mxu0
        %v611 = vadd.f32 0.0, %v610
        %612 = vmatprep.mubr.f32.mxu0 0.0
        %613 = vmatmul.mubr.f32.gmra.mrb[0].mxu0 %v374
        %v614 = vpop.f32.mrb[0].mxu0
        %v615 = vadd.f32 0.0, %v614
        %v616 = vpop.f32.mrb[0].mxu0
        %v617 = vadd.f32 0.0, %v616
        %618 = vmatprep.mubr.f32.mxu0 0.0
        %619 = vmatmul.mubr.f32.gmra.mrb[0].mxu0 %v377
        %v620 = vpop.f32.mrb[0].mxu0
        %v621 = vadd.f32 0.0, %v620
        %v622 = vpop.f32.mrb[0].mxu0
        %v623 = vadd.f32 0.0, %v622
        %624 = vmatprep.mubr.f32.mxu0 0.0
        %625 = vmatmul.mubr.f32.gmra.mrb[0].mxu0 %v380
        %v626 = vpop.f32.mrb[0].mxu0
        %v627 = vadd.f32 0.0, %v626
        %v628 = vpop.f32.mrb[0].mxu0
        %v629 = vadd.f32 0.0, %v628
        %630 = vmatprep.mubr.f32.mxu0 0.0
        %631 = vmatmul.mubr.f32.gmra.mrb[0].mxu0 %v383
        %v632 = vpop.f32.mrb[0].mxu0
        %v633 = vadd.f32 0.0, %v632
        %v634 = vpop.f32.mrb[0].mxu0
        %v635 = vadd.f32 0.0, %v634
        %636 = vmatprep.mubr.f32.mxu0 0.0
        %637 = vmatmul.mubr.f32.gmra.mrb[0].mxu0 %v386
        %v638 = vpop.f32.mrb[0].mxu0
        %v639 = vadd.f32 0.0, %v638
        %v640 = vpop.f32.mrb[0].mxu0
        %v641 = vadd.f32 0.0, %v640
        %642 = vmatprep.mubr.f32.mxu0 0.0
        %643 = vmatmul.mubr.f32.gmra.mrb[0].mxu0 %v389
        %v644 = vpop.f32.mrb[0].mxu0
        %v645 = vadd.f32 0.0, %v644
        %v646 = vpop.f32.mrb[0].mxu0
        %v647 = vadd.f32 0.0, %v646
        %648 = vmatprep.mubr.f32.mxu0 0.0
        %649 = vmatmul.mubr.f32.gmra.mrb[0].mxu0 %v392
        %v650 = vpop.f32.mrb[0].mxu0
        %v651 = vadd.f32 0.0, %v650
        %v652 = vpop.f32.mrb[0].mxu0
        %v653 = vadd.f32 0.0, %v652
        %654 = vmatprep.mubr.f32.mxu0 0.0
        %655 = vmatmul.mubr.f32.gmra.mrb[0].mxu0 %v395
        %v656 = vpop.f32.mrb[0].mxu0
        %v657 = vadd.f32 0.0, %v656
        %v658 = vpop.f32.mrb[0].mxu0
        %v659 = vadd.f32 0.0, %v658
        %660 = vmatprep.mubr.f32.mxu0 0.0
        %661 = vmatmul.mubr.f32.gmra.mrb[0].mxu0 %v398
        %v662 = vpop.f32.mrb[0].mxu0
        %v663 = vadd.f32 0.0, %v662
        %v664 = vpop.f32.mrb[0].mxu0
        %v665 = vadd.f32 0.0, %v664
        %666 = vmatprep.mubr.f32.mxu0 0.0
        %667 = vmatmul.mubr.f32.gmra.mrb[0].mxu0 %v401
        %v668 = vpop.f32.mrb[0].mxu0
        %v669 = vadd.f32 0.0, %v668
        %v670 = vpop.f32.mrb[0].mxu0
        %v671 = vadd.f32 0.0, %v670
        %672 = vmatprep.mubr.f32.mxu0 0.0
        %673 = vmatmul.mubr.f32.gmra.mrb[0].mxu0 %v404
        %v674 = vpop.f32.mrb[0].mxu0
        %v675 = vadd.f32 0.0, %v674
        %v676 = vpop.f32.mrb[0].mxu0
        %v677 = vadd.f32 0.0, %v676
        %678 = vdwg.mxu0
        %679 = vmatprep.subr.mxu0 %v417
        %680 = vmatpush1.msra.mxu0 %v414
        %681 = vmatprep.subr.mxu0 0.0
        %682 = vmatpush1.msra.mxu0 0.0
        %683 = vmatprep.subr.mxu0 0.0
        %684 = vmatpush1.msra.mxu0 0.0
        %685 = vmatprep.subr.mxu0 0.0
        %686 = vmatpush1.msra.mxu0 0.0
        %687 = vmatprep.subr.mxu0 0.0
        %688 = vmatpush1.msra.mxu0 0.0
        %689 = vmatprep.subr.mxu0 0.0
        %690 = vmatpush1.msra.mxu0 0.0
        %691 = vmatprep.subr.mxu0 0.0
        %692 = vmatpush1.msra.mxu0 0.0
        %693 = vmatprep.subr.mxu0 0.0
        %694 = vmatpush1.msra.mxu0 0.0
        %695 = vmatprep.subr.mxu0 0.0
        %696 = vmatpush1.msra.mxu0 0.0
        %697 = vmatprep.subr.mxu0 0.0
        %698 = vmatpush1.msra.mxu0 0.0
        %699 = vmatprep.subr.mxu0 0.0
        %700 = vmatpush1.msra.mxu0 0.0
        %701 = vmatprep.subr.mxu0 0.0
        %702 = vmatpush1.msra.mxu0 0.0
        %703 = vmatprep.subr.mxu0 0.0
        %704 = vmatpush1.msra.mxu0 0.0
        %705 = vmatprep.subr.mxu0 0.0
        %706 = vmatpush1.msra.mxu0 0.0
        %707 = vmatprep.subr.mxu0 0.0
        %708 = vmatpush1.msra.mxu0 0.0
        %709 = vmatprep.subr.mxu0 0.0
        %710 = vmatpush1.msra.mxu0 0.0
        %711 = vmatprep.subr.mxu0 0.0
        %712 = vmatpush1.msra.mxu0 0.0
        %713 = vmatprep.subr.mxu0 0.0
        %714 = vmatpush1.msra.mxu0 0.0
        %715 = vmatprep.subr.mxu0 0.0
        %716 = vmatpush1.msra.mxu0 0.0
        %717 = vmatprep.subr.mxu0 0.0
        %718 = vmatpush1.msra.mxu0 0.0
        %719 = vmatprep.subr.mxu0 0.0
        %720 = vmatpush1.msra.mxu0 0.0
        %721 = vmatprep.subr.mxu0 0.0
        %722 = vmatpush1.msra.mxu0 0.0
        %723 = vmatprep.subr.mxu0 0.0
        %724 = vmatpush1.msra.mxu0 0.0
        %725 = vmatprep.subr.mxu0 0.0
        %726 = vmatpush1.msra.mxu0 0.0
        %727 = vmatprep.subr.mxu0 0.0
        %728 = vmatpush1.msra.mxu0 0.0
        %729 = vmatprep.subr.mxu0 0.0
        %730 = vmatpush1.msra.mxu0 0.0
        %731 = vmatprep.subr.mxu0 0.0
        %732 = vmatpush1.msra.mxu0 0.0
        %733 = vmatprep.subr.mxu0 0.0
        %734 = vmatpush1.msra.mxu0 0.0
        %735 = vmatprep.subr.mxu0 0.0
        %736 = vmatpush1.msra.mxu0 0.0
        %737 = vmatprep.subr.mxu0 0.0
        %738 = vmatpush1.msra.mxu0 0.0
        %739 = vmatprep.subr.mxu0 0.0
        %740 = vmatpush1.msra.mxu0 0.0
        %741 = vmatprep.subr.mxu0 0.0
        %742 = vmatpush1.msra.mxu0 0.0
        %743 = vmatprep.mubr.f32.mxu0 0.0
        %744 = vmatmul.mubr.f32.gmra.mrb[0].mxu0 %v311
        %v745 = vpop.f32.mrb[0].mxu0
        %v746 = vadd.f32 0.0, %v745
        %v747 = vpop.f32.mrb[0].mxu0
        %v748 = vadd.f32 0.0, %v747
        %749 = vmatprep.mubr.f32.mxu0 0.0
        %750 = vmatmul.mubr.f32.gmra.mrb[0].mxu0 %v314
        %v751 = vpop.f32.mrb[0].mxu0
        %v752 = vadd.f32 0.0, %v751
        %v753 = vpop.f32.mrb[0].mxu0
        %v754 = vadd.f32 0.0, %v753
        %755 = vmatprep.mubr.f32.mxu0 0.0
        %756 = vmatmul.mubr.f32.gmra.mrb[0].mxu0 %v317
        %v757 = vpop.f32.mrb[0].mxu0
        %v758 = vadd.f32 0.0, %v757
        %v759 = vpop.f32.mrb[0].mxu0
        %v760 = vadd.f32 0.0, %v759
        %761 = vmatprep.mubr.f32.mxu0 0.0
        %762 = vmatmul.mubr.f32.gmra.mrb[0].mxu0 %v320
        %v763 = vpop.f32.mrb[0].mxu0
        %v764 = vadd.f32 0.0, %v763
        %v765 = vpop.f32.mrb[0].mxu0
        %v766 = vadd.f32 0.0, %v765
        %767 = vmatprep.mubr.f32.mxu0 0.0
        %768 = vmatmul.mubr.f32.gmra.mrb[0].mxu0 %v323
        %v769 = vpop.f32.mrb[0].mxu0
        %v770 = vadd.f32 0.0, %v769
        %v771 = vpop.f32.mrb[0].mxu0
        %v772 = vadd.f32 0.0, %v771
        %773 = vmatprep.mubr.f32.mxu0 0.0
        %774 = vmatmul.mubr.f32.gmra.mrb[0].mxu0 %v326
        %v775 = vpop.f32.mrb[0].mxu0
        %v776 = vadd.f32 0.0, %v775
        %v777 = vpop.f32.mrb[0].mxu0
        %v778 = vadd.f32 0.0, %v777
        %779 = vmatprep.mubr.f32.mxu0 0.0
        %780 = vmatmul.mubr.f32.gmra.mrb[0].mxu0 %v329
        %v781 = vpop.f32.mrb[0].mxu0
        %v782 = vadd.f32 0.0, %v781
        %v783 = vpop.f32.mrb[0].mxu0
        %v784 = vadd.f32 0.0, %v783
        %785 = vmatprep.mubr.f32.mxu0 0.0
        %786 = vmatmul.mubr.f32.gmra.mrb[0].mxu0 %v332
        %v787 = vpop.f32.mrb[0].mxu0
        %v788 = vadd.f32 0.0, %v787
        %v789 = vpop.f32.mrb[0].mxu0
        %v790 = vadd.f32 0.0, %v789
        %791 = vmatprep.mubr.f32.mxu0 0.0
        %792 = vmatmul.mubr.f32.gmra.mrb[0].mxu0 %v335
        %v793 = vpop.f32.mrb[0].mxu0
        %v794 = vadd.f32 0.0, %v793
        %v795 = vpop.f32.mrb[0].mxu0
        %v796 = vadd.f32 0.0, %v795
        %797 = vmatprep.mubr.f32.mxu0 0.0
        %798 = vmatmul.mubr.f32.gmra.mrb[0].mxu0 %v338
        %v799 = vpop.f32.mrb[0].mxu0
        %v800 = vadd.f32 0.0, %v799
        %v801 = vpop.f32.mrb[0].mxu0
        %v802 = vadd.f32 0.0, %v801
        %803 = vmatprep.mubr.f32.mxu0 0.0
        %804 = vmatmul.mubr.f32.gmra.mrb[0].mxu0 %v341
        %v805 = vpop.f32.mrb[0].mxu0
        %v806 = vadd.f32 0.0, %v805
        %v807 = vpop.f32.mrb[0].mxu0
        %v808 = vadd.f32 0.0, %v807
        %809 = vmatprep.mubr.f32.mxu0 0.0
        %810 = vmatmul.mubr.f32.gmra.mrb[0].mxu0 %v344
        %v811 = vpop.f32.mrb[0].mxu0
        %v812 = vadd.f32 0.0, %v811
        %v813 = vpop.f32.mrb[0].mxu0
        %v814 = vadd.f32 0.0, %v813
        %815 = vmatprep.mubr.f32.mxu0 0.0
        %816 = vmatmul.mubr.f32.gmra.mrb[0].mxu0 %v347
        %v817 = vpop.f32.mrb[0].mxu0
        %v818 = vadd.f32 0.0, %v817
        %v819 = vpop.f32.mrb[0].mxu0
        %v820 = vadd.f32 0.0, %v819
        %821 = vmatprep.mubr.f32.mxu0 0.0
        %822 = vmatmul.mubr.f32.gmra.mrb[0].mxu0 %v350
        %v823 = vpop.f32.mrb[0].mxu0
        %v824 = vadd.f32 0.0, %v823
        %v825 = vpop.f32.mrb[0].mxu0
        %v826 = vadd.f32 0.0, %v825
        %827 = vmatprep.mubr.f32.mxu0 0.0
        %828 = vmatmul.mubr.f32.gmra.mrb[0].mxu0 %v353
        %v829 = vpop.f32.mrb[0].mxu0
        %v830 = vadd.f32 0.0, %v829
        %v831 = vpop.f32.mrb[0].mxu0
        %v832 = vadd.f32 0.0, %v831
        %833 = vmatprep.mubr.f32.mxu0 0.0
        %834 = vmatmul.mubr.f32.gmra.mrb[0].mxu0 %v356
        %v835 = vpop.f32.mrb[0].mxu0
        %v836 = vadd.f32 0.0, %v835
        %v837 = vpop.f32.mrb[0].mxu0
        %v838 = vadd.f32 0.0, %v837
        %839 = vmatprep.mubr.f32.mxu0 0.0
        %840 = vmatmul.mubr.f32.gmra.mrb[0].mxu0 %v359
        %v841 = vpop.f32.mrb[0].mxu0
        %v842 = vadd.f32 0.0, %v841
        %v843 = vpop.f32.mrb[0].mxu0
        %v844 = vadd.f32 0.0, %v843
        %845 = vmatprep.mubr.f32.mxu0 0.0
        %846 = vmatmul.mubr.f32.gmra.mrb[0].mxu0 %v362
        %v847 = vpop.f32.mrb[0].mxu0
        %v848 = vadd.f32 0.0, %v847
        %v849 = vpop.f32.mrb[0].mxu0
        %v850 = vadd.f32 0.0, %v849
        %851 = vmatprep.mubr.f32.mxu0 0.0
        %852 = vmatmul.mubr.f32.gmra.mrb[0].mxu0 %v365
        %v853 = vpop.f32.mrb[0].mxu0
        %v854 = vadd.f32 0.0, %v853
        %v855 = vpop.f32.mrb[0].mxu0
        %v856 = vadd.f32 0.0, %v855
        %857 = vmatprep.mubr.f32.mxu0 0.0
        %858 = vmatmul.mubr.f32.gmra.mrb[0].mxu0 %v368
        %v859 = vpop.f32.mrb[0].mxu0
        %v860 = vadd.f32 0.0, %v859
        %v861 = vpop.f32.mrb[0].mxu0
        %v862 = vadd.f32 0.0, %v861
        %863 = vmatprep.mubr.f32.mxu0 0.0
        %864 = vmatmul.mubr.f32.gmra.mrb[0].mxu0 %v371
        %v865 = vpop.f32.mrb[0].mxu0
        %v866 = vadd.f32 0.0, %v865
        %v867 = vpop.f32.mrb[0].mxu0
        %v868 = vadd.f32 0.0, %v867
        %869 = vmatprep.mubr.f32.mxu0 0.0
        %870 = vmatmul.mubr.f32.gmra.mrb[0].mxu0 %v374
        %v871 = vpop.f32.mrb[0].mxu0
        %v872 = vadd.f32 0.0, %v871
        %v873 = vpop.f32.mrb[0].mxu0
        %v874 = vadd.f32 0.0, %v873
        %875 = vmatprep.mubr.f32.mxu0 0.0
        %876 = vmatmul.mubr.f32.gmra.mrb[0].mxu0 %v377
        %v877 = vpop.f32.mrb[0].mxu0
        %v878 = vadd.f32 0.0, %v877
        %v879 = vpop.f32.mrb[0].mxu0
        %v880 = vadd.f32 0.0, %v879
        %881 = vmatprep.mubr.f32.mxu0 0.0
        %882 = vmatmul.mubr.f32.gmra.mrb[0].mxu0 %v380
        %v883 = vpop.f32.mrb[0].mxu0
        %v884 = vadd.f32 0.0, %v883
        %v885 = vpop.f32.mrb[0].mxu0
        %v886 = vadd.f32 0.0, %v885
        %887 = vmatprep.mubr.f32.mxu0 0.0
        %888 = vmatmul.mubr.f32.gmra.mrb[0].mxu0 %v383
        %v889 = vpop.f32.mrb[0].mxu0
        %v890 = vadd.f32 0.0, %v889
        %v891 = vpop.f32.mrb[0].mxu0
        %v892 = vadd.f32 0.0, %v891
        %893 = vmatprep.mubr.f32.mxu0 0.0
        %894 = vmatmul.mubr.f32.gmra.mrb[0].mxu0 %v386
        %v895 = vpop.f32.mrb[0].mxu0
        %v896 = vadd.f32 0.0, %v895
        %v897 = vpop.f32.mrb[0].mxu0
        %v898 = vadd.f32 0.0, %v897
        %899 = vmatprep.mubr.f32.mxu0 0.0
        %900 = vmatmul.mubr.f32.gmra.mrb[0].mxu0 %v389
        %v901 = vpop.f32.mrb[0].mxu0
        %v902 = vadd.f32 0.0, %v901
        %v903 = vpop.f32.mrb[0].mxu0
        %v904 = vadd.f32 0.0, %v903
        %905 = vmatprep.mubr.f32.mxu0 0.0
        %906 = vmatmul.mubr.f32.gmra.mrb[0].mxu0 %v392
        %v907 = vpop.f32.mrb[0].mxu0
        %v908 = vadd.f32 0.0, %v907
        %v909 = vpop.f32.mrb[0].mxu0
        %v910 = vadd.f32 0.0, %v909
        %911 = vmatprep.mubr.f32.mxu0 0.0
        %912 = vmatmul.mubr.f32.gmra.mrb[0].mxu0 %v395
        %v913 = vpop.f32.mrb[0].mxu0
        %v914 = vadd.f32 0.0, %v913
        %v915 = vpop.f32.mrb[0].mxu0
        %v916 = vadd.f32 0.0, %v915
        %917 = vmatprep.mubr.f32.mxu0 0.0
        %918 = vmatmul.mubr.f32.gmra.mrb[0].mxu0 %v398
        %v919 = vpop.f32.mrb[0].mxu0
        %v920 = vadd.f32 0.0, %v919
        %v921 = vpop.f32.mrb[0].mxu0
        %v922 = vadd.f32 0.0, %v921
        %923 = vmatprep.mubr.f32.mxu0 0.0
        %924 = vmatmul.mubr.f32.gmra.mrb[0].mxu0 %v401
        %v925 = vpop.f32.mrb[0].mxu0
        %v926 = vadd.f32 0.0, %v925
        %v927 = vpop.f32.mrb[0].mxu0
        %v928 = vadd.f32 0.0, %v927
        %929 = vmatprep.mubr.f32.mxu0 0.0
        %930 = vmatmul.mubr.f32.gmra.mrb[0].mxu0 %v404
        %v931 = vpop.f32.mrb[0].mxu0
        %v932 = vadd.f32 0.0, %v931
        %v933 = vpop.f32.mrb[0].mxu0
        %v934 = vadd.f32 0.0, %v933
        %935 = vdwg.mxu0
        %936 = vmatprep.subr.mxu0 0.0
        %937 = vmatpush1.msra.mxu0 %v420
        %938 = vmatprep.subr.mxu0 0.0
        %939 = vmatpush1.msra.mxu0 0.0
        %940 = vmatprep.subr.mxu0 0.0
        %941 = vmatpush1.msra.mxu0 0.0
        %942 = vmatprep.subr.mxu0 0.0
        %943 = vmatpush1.msra.mxu0 0.0
        %944 = vmatprep.subr.mxu0 0.0
        %945 = vmatpush1.msra.mxu0 0.0
        %946 = vmatprep.subr.mxu0 0.0
        %947 = vmatpush1.msra.mxu0 0.0
        %948 = vmatprep.subr.mxu0 0.0
        %949 = vmatpush1.msra.mxu0 0.0
        %950 = vmatprep.subr.mxu0 0.0
        %951 = vmatpush1.msra.mxu0 0.0
        %952 = vmatprep.subr.mxu0 0.0
        %953 = vmatpush1.msra.mxu0 0.0
        %954 = vmatprep.subr.mxu0 0.0
        %955 = vmatpush1.msra.mxu0 0.0
        %956 = vmatprep.subr.mxu0 0.0
        %957 = vmatpush1.msra.mxu0 0.0
        %958 = vmatprep.subr.mxu0 0.0
        %959 = vmatpush1.msra.mxu0 0.0
        %960 = vmatprep.subr.mxu0 0.0
        %961 = vmatpush1.msra.mxu0 0.0
        %962 = vmatprep.subr.mxu0 0.0
        %963 = vmatpush1.msra.mxu0 0.0
        %964 = vmatprep.subr.mxu0 0.0
        %965 = vmatpush1.msra.mxu0 0.0
        %966 = vmatprep.subr.mxu0 0.0
        %967 = vmatpush1.msra.mxu0 0.0
        %968 = vmatprep.subr.mxu0 0.0
        %969 = vmatpush1.msra.mxu0 0.0
        %970 = vmatprep.subr.mxu0 0.0
        %971 = vmatpush1.msra.mxu0 0.0
        %972 = vmatprep.subr.mxu0 0.0
        %973 = vmatpush1.msra.mxu0 0.0
        %974 = vmatprep.subr.mxu0 0.0
        %975 = vmatpush1.msra.mxu0 0.0
        %976 = vmatprep.subr.mxu0 0.0
        %977 = vmatpush1.msra.mxu0 0.0
        %978 = vmatprep.subr.mxu0 0.0
        %979 = vmatpush1.msra.mxu0 0.0
        %980 = vmatprep.subr.mxu0 0.0
        %981 = vmatpush1.msra.mxu0 0.0
        %982 = vmatprep.subr.mxu0 0.0
        %983 = vmatpush1.msra.mxu0 0.0
        %984 = vmatprep.subr.mxu0 0.0
        %985 = vmatpush1.msra.mxu0 0.0
        %986 = vmatprep.subr.mxu0 0.0
        %987 = vmatpush1.msra.mxu0 0.0
        %988 = vmatprep.subr.mxu0 0.0
        %989 = vmatpush1.msra.mxu0 0.0
        %990 = vmatprep.subr.mxu0 0.0
        %991 = vmatpush1.msra.mxu0 0.0
        %992 = vmatprep.subr.mxu0 0.0
        %993 = vmatpush1.msra.mxu0 0.0
        %994 = vmatprep.subr.mxu0 0.0
        %995 = vmatpush1.msra.mxu0 0.0
        %996 = vmatprep.subr.mxu0 0.0
        %997 = vmatpush1.msra.mxu0 0.0
        %998 = vmatprep.subr.mxu0 0.0
        %999 = vmatpush1.msra.mxu0 0.0
        %1000 = vmatprep.mubr.f32.mxu0 0.0
        %1001 = vmatmul.mubr.f32.gmra.mrb[0].mxu0 %v311
        %v1002 = vpop.f32.mrb[0].mxu0
        %v1003 = vadd.f32 0.0, %v1002
        %v1004 = vpop.f32.mrb[0].mxu0
        %1005 = vmatprep.mubr.f32.mxu0 0.0
        %1006 = vmatmul.mubr.f32.gmra.mrb[0].mxu0 %v314
        %v1007 = vpop.f32.mrb[0].mxu0
        %v1008 = vadd.f32 0.0, %v1007
        %v1009 = vpop.f32.mrb[0].mxu0
        %1010 = vmatprep.mubr.f32.mxu0 0.0
        %1011 = vmatmul.mubr.f32.gmra.mrb[0].mxu0 %v317
        %v1012 = vpop.f32.mrb[0].mxu0
        %v1013 = vadd.f32 0.0, %v1012
        %v1014 = vpop.f32.mrb[0].mxu0
        %1015 = vmatprep.mubr.f32.mxu0 0.0
        %1016 = vmatmul.mubr.f32.gmra.mrb[0].mxu0 %v320
        %v1017 = vpop.f32.mrb[0].mxu0
        %v1018 = vadd.f32 0.0, %v1017
        %v1019 = vpop.f32.mrb[0].mxu0
        %1020 = vmatprep.mubr.f32.mxu0 0.0
        %1021 = vmatmul.mubr.f32.gmra.mrb[0].mxu0 %v323
        %v1022 = vpop.f32.mrb[0].mxu0
        %v1023 = vadd.f32 0.0, %v1022
        %v1024 = vpop.f32.mrb[0].mxu0
        %1025 = vmatprep.mubr.f32.mxu0 0.0
        %1026 = vmatmul.mubr.f32.gmra.mrb[0].mxu0 %v326
        %v1027 = vpop.f32.mrb[0].mxu0
        %v1028 = vadd.f32 0.0, %v1027
        %v1029 = vpop.f32.mrb[0].mxu0
        %1030 = vmatprep.mubr.f32.mxu0 0.0
        %1031 = vmatmul.mubr.f32.gmra.mrb[0].mxu0 %v329
        %v1032 = vpop.f32.mrb[0].mxu0
        %v1033 = vadd.f32 0.0, %v1032
        %v1034 = vpop.f32.mrb[0].mxu0
        %1035 = vmatprep.mubr.f32.mxu0 0.0
        %1036 = vmatmul.mubr.f32.gmra.mrb[0].mxu0 %v332
        %v1037 = vpop.f32.mrb[0].mxu0
        %v1038 = vadd.f32 0.0, %v1037
        %v1039 = vpop.f32.mrb[0].mxu0
        %1040 = vmatprep.mubr.f32.mxu0 0.0
        %1041 = vmatmul.mubr.f32.gmra.mrb[0].mxu0 %v335
        %v1042 = vpop.f32.mrb[0].mxu0
        %v1043 = vadd.f32 0.0, %v1042
        %v1044 = vpop.f32.mrb[0].mxu0
        %1045 = vmatprep.mubr.f32.mxu0 0.0
        %1046 = vmatmul.mubr.f32.gmra.mrb[0].mxu0 %v338
        %v1047 = vpop.f32.mrb[0].mxu0
        %v1048 = vadd.f32 0.0, %v1047
        %v1049 = vpop.f32.mrb[0].mxu0
        %1050 = vmatprep.mubr.f32.mxu0 0.0
        %1051 = vmatmul.mubr.f32.gmra.mrb[0].mxu0 %v341
        %v1052 = vpop.f32.mrb[0].mxu0
        %v1053 = vadd.f32 0.0, %v1052
        %v1054 = vpop.f32.mrb[0].mxu0
        %1055 = vmatprep.mubr.f32.mxu0 0.0
        %1056 = vmatmul.mubr.f32.gmra.mrb[0].mxu0 %v344
        %v1057 = vpop.f32.mrb[0].mxu0
        %v1058 = vadd.f32 0.0, %v1057
        %v1059 = vpop.f32.mrb[0].mxu0
        %1060 = vmatprep.mubr.f32.mxu0 0.0
        %1061 = vmatmul.mubr.f32.gmra.mrb[0].mxu0 %v347
        %v1062 = vpop.f32.mrb[0].mxu0
        %v1063 = vadd.f32 0.0, %v1062
        %v1064 = vpop.f32.mrb[0].mxu0
        %1065 = vmatprep.mubr.f32.mxu0 0.0
        %1066 = vmatmul.mubr.f32.gmra.mrb[0].mxu0 %v350
        %v1067 = vpop.f32.mrb[0].mxu0
        %v1068 = vadd.f32 0.0, %v1067
        %v1069 = vpop.f32.mrb[0].mxu0
        %1070 = vmatprep.mubr.f32.mxu0 0.0
        %1071 = vmatmul.mubr.f32.gmra.mrb[0].mxu0 %v353
        %v1072 = vpop.f32.mrb[0].mxu0
        %v1073 = vadd.f32 0.0, %v1072
        %v1074 = vpop.f32.mrb[0].mxu0
        %1075 = vmatprep.mubr.f32.mxu0 0.0
        %1076 = vmatmul.mubr.f32.gmra.mrb[0].mxu0 %v356
        %v1077 = vpop.f32.mrb[0].mxu0
        %v1078 = vadd.f32 0.0, %v1077
        %v1079 = vpop.f32.mrb[0].mxu0
        %1080 = vmatprep.mubr.f32.mxu0 0.0
        %1081 = vmatmul.mubr.f32.gmra.mrb[0].mxu0 %v359
        %v1082 = vpop.f32.mrb[0].mxu0
        %v1083 = vadd.f32 0.0, %v1082
        %v1084 = vpop.f32.mrb[0].mxu0
        %1085 = vmatprep.mubr.f32.mxu0 0.0
        %1086 = vmatmul.mubr.f32.gmra.mrb[0].mxu0 %v362
        %v1087 = vpop.f32.mrb[0].mxu0
        %v1088 = vadd.f32 0.0, %v1087
        %v1089 = vpop.f32.mrb[0].mxu0
        %1090 = vmatprep.mubr.f32.mxu0 0.0
        %1091 = vmatmul.mubr.f32.gmra.mrb[0].mxu0 %v365
        %v1092 = vpop.f32.mrb[0].mxu0
        %v1093 = vadd.f32 0.0, %v1092
        %v1094 = vpop.f32.mrb[0].mxu0
        %1095 = vmatprep.mubr.f32.mxu0 0.0
        %1096 = vmatmul.mubr.f32.gmra.mrb[0].mxu0 %v368
        %v1097 = vpop.f32.mrb[0].mxu0
        %v1098 = vadd.f32 0.0, %v1097
        %v1099 = vpop.f32.mrb[0].mxu0
        %1100 = vmatprep.mubr.f32.mxu0 0.0
        %1101 = vmatmul.mubr.f32.gmra.mrb[0].mxu0 %v371
        %v1102 = vpop.f32.mrb[0].mxu0
        %v1103 = vadd.f32 0.0, %v1102
        %v1104 = vpop.f32.mrb[0].mxu0
        %1105 = vmatprep.mubr.f32.mxu0 0.0
        %1106 = vmatmul.mubr.f32.gmra.mrb[0].mxu0 %v374
        %v1107 = vpop.f32.mrb[0].mxu0
        %v1108 = vadd.f32 0.0, %v1107
        %v1109 = vpop.f32.mrb[0].mxu0
        %1110 = vmatprep.mubr.f32.mxu0 0.0
        %1111 = vmatmul.mubr.f32.gmra.mrb[0].mxu0 %v377
        %v1112 = vpop.f32.mrb[0].mxu0
        %v1113 = vadd.f32 0.0, %v1112
        %v1114 = vpop.f32.mrb[0].mxu0
        %1115 = vmatprep.mubr.f32.mxu0 0.0
        %1116 = vmatmul.mubr.f32.gmra.mrb[0].mxu0 %v380
        %v1117 = vpop.f32.mrb[0].mxu0
        %v1118 = vadd.f32 0.0, %v1117
        %v1119 = vpop.f32.mrb[0].mxu0
        %1120 = vmatprep.mubr.f32.mxu0 0.0
        %1121 = vmatmul.mubr.f32.gmra.mrb[0].mxu0 %v383
        %v1122 = vpop.f32.mrb[0].mxu0
        %v1123 = vadd.f32 0.0, %v1122
        %v1124 = vpop.f32.mrb[0].mxu0
        %1125 = vmatprep.mubr.f32.mxu0 0.0
        %1126 = vmatmul.mubr.f32.gmra.mrb[0].mxu0 %v386
        %v1127 = vpop.f32.mrb[0].mxu0
        %v1128 = vadd.f32 0.0, %v1127
        %v1129 = vpop.f32.mrb[0].mxu0
        %1130 = vmatprep.mubr.f32.mxu0 0.0
        %1131 = vmatmul.mubr.f32.gmra.mrb[0].mxu0 %v389
        %v1132 = vpop.f32.mrb[0].mxu0
        %v1133 = vadd.f32 0.0, %v1132
        %v1134 = vpop.f32.mrb[0].mxu0
        %1135 = vmatprep.mubr.f32.mxu0 0.0
        %1136 = vmatmul.mubr.f32.gmra.mrb[0].mxu0 %v392
        %v1137 = vpop.f32.mrb[0].mxu0
        %v1138 = vadd.f32 0.0, %v1137
        %v1139 = vpop.f32.mrb[0].mxu0
        %1140 = vmatprep.mubr.f32.mxu0 0.0
        %1141 = vmatmul.mubr.f32.gmra.mrb[0].mxu0 %v395
        %v1142 = vpop.f32.mrb[0].mxu0
        %v1143 = vadd.f32 0.0, %v1142
        %v1144 = vpop.f32.mrb[0].mxu0
        %1145 = vmatprep.mubr.f32.mxu0 0.0
        %1146 = vmatmul.mubr.f32.gmra.mrb[0].mxu0 %v398
        %v1147 = vpop.f32.mrb[0].mxu0
        %v1148 = vadd.f32 0.0, %v1147
        %v1149 = vpop.f32.mrb[0].mxu0
        %1150 = vmatprep.mubr.f32.mxu0 0.0
        %1151 = vmatmul.mubr.f32.gmra.mrb[0].mxu0 %v401
        %v1152 = vpop.f32.mrb[0].mxu0
        %v1153 = vadd.f32 0.0, %v1152
        %v1154 = vpop.f32.mrb[0].mxu0
        %1155 = vmatprep.mubr.f32.mxu0 0.0
        %1156 = vmatmul.mubr.f32.gmra.mrb[0].mxu0 %v404
        %v1157 = vpop.f32.mrb[0].mxu0
        %v1158 = vadd.f32 0.0, %v1157
        %v1159 = vpop.f32.mrb[0].mxu0
        %1160 = vdwg.mxu0
        %v1161 = vpow.pop %v489
        %v1162 = vpow.pop %v491
        %v1163 = vpow.pop %v746
        %v1164 = vpow.pop %v748
        %v1165 = vpow.pop %v1003
        %v1166 = vpow.pop %v495
        %v1167 = vpow.pop %v497
        %v1168 = vpow.pop %v752
        %v1169 = vpow.pop %v754
        %v1170 = vpow.pop %v1008
        %v1171 = vpow.pop %v501
        %v1172 = vpow.pop %v503
        %v1173 = vpow.pop %v758
        %v1174 = vpow.pop %v760
        %v1175 = vpow.pop %v1013
        %v1176 = vpow.pop %v507
        %v1177 = vpow.pop %v509
        %v1178 = vpow.pop %v764
        %v1179 = vpow.pop %v766
        %v1180 = vpow.pop %v1018
        %v1181 = vpow.pop %v513
        %v1182 = vpow.pop %v515
        %v1183 = vpow.pop %v770
        %v1184 = vpow.pop %v772
        %v1185 = vpow.pop %v1023
        %v1186 = vpow.pop %v519
        %v1187 = vpow.pop %v521
        %v1188 = vpow.pop %v776
        %v1189 = vpow.pop %v778
        %v1190 = vpow.pop %v1028
        %v1191 = vpow.pop %v525
        %v1192 = vpow.pop %v527
        %v1193 = vpow.pop %v782
        %v1194 = vpow.pop %v784
        %v1195 = vpow.pop %v1033
        %v1196 = vpow.pop %v531
        %v1197 = vpow.pop %v533
        %v1198 = vpow.pop %v788
        %v1199 = vpow.pop %v790
        %v1200 = vpow.pop %v1038
        %v1201 = vpow.pop %v537
        %v1202 = vpow.pop %v539
        %v1203 = vpow.pop %v794
        %v1204 = vpow.pop %v796
        %v1205 = vpow.pop %v1043
        %v1206 = vpow.pop %v543
        %v1207 = vpow.pop %v545
        %v1208 = vpow.pop %v800
        %v1209 = vpow.pop %v802
        %v1210 = vpow.pop %v1048
        %v1211 = vpow.pop %v549
        %v1212 = vpow.pop %v551
        %v1213 = vpow.pop %v806
        %v1214 = vpow.pop %v808
        %v1215 = vpow.pop %v1053
        %v1216 = vpow.pop %v555
        %v1217 = vpow.pop %v557
        %v1218 = vpow.pop %v812
        %v1219 = vpow.pop %v814
        %v1220 = vpow.pop %v1058
        %v1221 = vpow.pop %v561
        %v1222 = vpow.pop %v563
        %v1223 = vpow.pop %v818
        %v1224 = vpow.pop %v820
        %v1225 = vpow.pop %v1063
        %v1226 = vpow.pop %v567
        %v1227 = vpow.pop %v569
        %v1228 = vpow.pop %v824
        %v1229 = vpow.pop %v826
        %v1230 = vpow.pop %v1068
        %v1231 = vpow.pop %v573
        %v1232 = vpow.pop %v575
        %v1233 = vpow.pop %v830
        %v1234 = vpow.pop %v832
        %v1235 = vpow.pop %v1073
        %v1236 = vpow.pop %v579
        %v1237 = vpow.pop %v581
        %v1238 = vpow.pop %v836
        %v1239 = vpow.pop %v838
        %v1240 = vpow.pop %v1078
        %v1241 = vpow.pop %v585
        %v1242 = vpow.pop %v587
        %v1243 = vpow.pop %v842
        %v1244 = vpow.pop %v844
        %v1245 = vpow.pop %v1083
        %v1246 = vpow.pop %v591
        %v1247 = vpow.pop %v593
        %v1248 = vpow.pop %v848
        %v1249 = vpow.pop %v850
        %v1250 = vpow.pop %v1088
        %v1251 = vpow.pop %v597
        %v1252 = vpow.pop %v599
        %v1253 = vpow.pop %v854
        %v1254 = vpow.pop %v856
        %v1255 = vpow.pop %v1093
        %v1256 = vpow.pop %v603
        %v1257 = vpow.pop %v605
        %v1258 = vpow.pop %v860
        %v1259 = vpow.pop %v862
        %v1260 = vpow.pop %v1098
        %v1261 = vpow.pop %v609
        %v1262 = vpow.pop %v611
        %v1263 = vpow.pop %v866
        %v1264 = vpow.pop %v868
        %v1265 = vpow.pop %v1103
        %v1266 = vpow.pop %v615
        %v1267 = vpow.pop %v617
        %v1268 = vpow.pop %v872
        %v1269 = vpow.pop %v874
        %v1270 = vpow.pop %v1108
        %v1271 = vpow.pop %v621
        %v1272 = vpow.pop %v623
        %v1273 = vpow.pop %v878
        %v1274 = vpow.pop %v880
        %v1275 = vpow.pop %v1113
        %v1276 = vpow.pop %v627
        %v1277 = vpow.pop %v629
        %v1278 = vpow.pop %v884
        %v1279 = vpow.pop %v886
        %v1280 = vpow.pop %v1118
        %v1281 = vpow.pop %v633
        %v1282 = vpow.pop %v635
        %v1283 = vpow.pop %v890
        %v1284 = vpow.pop %v892
        %v1285 = vpow.pop %v1123
        %v1286 = vpow.pop %v639
        %v1287 = vpow.pop %v641
        %v1288 = vpow.pop %v896
        %v1289 = vpow.pop %v898
        %v1290 = vpow.pop %v1128
        %v1291 = vpow.pop %v645
        %v1292 = vpow.pop %v647
        %v1293 = vpow.pop %v902
        %v1294 = vpow.pop %v904
        %v1295 = vpow.pop %v1133
        %v1296 = vpow.pop %v651
        %v1297 = vpow.pop %v653
        %v1298 = vpow.pop %v908
        %v1299 = vpow.pop %v910
        %v1300 = vpow.pop %v1138
        %v1301 = vpow.pop %v657
        %v1302 = vpow.pop %v659
        %v1303 = vpow.pop %v914
        %v1304 = vpow.pop %v916
        %v1305 = vpow.pop %v1143
        %v1306 = vpow.pop %v663
        %v1307 = vpow.pop %v665
        %v1308 = vpow.pop %v920
        %v1309 = vpow.pop %v922
        %v1310 = vpow.pop %v1148
        %v1311 = vpow.pop %v669
        %v1312 = vpow.pop %v671
        %v1313 = vpow.pop %v926
        %v1314 = vpow.pop %v928
        %v1315 = vpow.pop %v1153
        %v1316 = vpow.pop %v675
        %v1317 = vpow.pop %v677
        %v1318 = vpow.pop %v932
        %v1319 = vpow.pop %v934
        %v1320 = vpow.pop %v1158
        %v1321 = vpack.c.bf16 %v1166, %v1161
        %v1322 = vpack.c.bf16 %v1167, %v1162
        %v1323 = vpack.c.bf16 %v1168, %v1163
        %v1324 = vpack.c.bf16 %v1169, %v1164
        %v1325 = vpack.c.bf16 %v1170, %v1165
        %v1326 = vpack.c.bf16 %v1176, %v1171
        %v1327 = vpack.c.bf16 %v1177, %v1172
        %v1328 = vpack.c.bf16 %v1178, %v1173
        %v1329 = vpack.c.bf16 %v1179, %v1174
        %v1330 = vpack.c.bf16 %v1180, %v1175
        %v1331 = vpack.c.bf16 %v1186, %v1181
        %v1332 = vpack.c.bf16 %v1187, %v1182
        %v1333 = vpack.c.bf16 %v1188, %v1183
        %v1334 = vpack.c.bf16 %v1189, %v1184
        %v1335 = vpack.c.bf16 %v1190, %v1185
        %v1336 = vpack.c.bf16 %v1196, %v1191
        %v1337 = vpack.c.bf16 %v1197, %v1192
        %v1338 = vpack.c.bf16 %v1198, %v1193
        %v1339 = vpack.c.bf16 %v1199, %v1194
        %v1340 = vpack.c.bf16 %v1200, %v1195
        %v1341 = vpack.c.bf16 %v1206, %v1201
        %v1342 = vpack.c.bf16 %v1207, %v1202
        %v1343 = vpack.c.bf16 %v1208, %v1203
        %v1344 = vpack.c.bf16 %v1209, %v1204
        %v1345 = vpack.c.bf16 %v1210, %v1205
        %v1346 = vpack.c.bf16 %v1216, %v1211
        %v1347 = vpack.c.bf16 %v1217, %v1212
        %v1348 = vpack.c.bf16 %v1218, %v1213
        %v1349 = vpack.c.bf16 %v1219, %v1214
        %v1350 = vpack.c.bf16 %v1220, %v1215
        %v1351 = vpack.c.bf16 %v1226, %v1221
        %v1352 = vpack.c.bf16 %v1227, %v1222
        %v1353 = vpack.c.bf16 %v1228, %v1223
        %v1354 = vpack.c.bf16 %v1229, %v1224
        %v1355 = vpack.c.bf16 %v1230, %v1225
        %v1356 = vpack.c.bf16 %v1236, %v1231
        %v1357 = vpack.c.bf16 %v1237, %v1232
        %v1358 = vpack.c.bf16 %v1238, %v1233
        %v1359 = vpack.c.bf16 %v1239, %v1234
        %v1360 = vpack.c.bf16 %v1240, %v1235
        %v1361 = vpack.c.bf16 %v1246, %v1241
        %v1362 = vpack.c.bf16 %v1247, %v1242
        %v1363 = vpack.c.bf16 %v1248, %v1243
        %v1364 = vpack.c.bf16 %v1249, %v1244
        %v1365 = vpack.c.bf16 %v1250, %v1245
        %v1366 = vpack.c.bf16 %v1256, %v1251
        %v1367 = vpack.c.bf16 %v1257, %v1252
        %v1368 = vpack.c.bf16 %v1258, %v1253
        %v1369 = vpack.c.bf16 %v1259, %v1254
        %v1370 = vpack.c.bf16 %v1260, %v1255
        %v1371 = vpack.c.bf16 %v1266, %v1261
        %v1372 = vpack.c.bf16 %v1267, %v1262
        %v1373 = vpack.c.bf16 %v1268, %v1263
        %v1374 = vpack.c.bf16 %v1269, %v1264
        %v1375 = vpack.c.bf16 %v1270, %v1265
        %v1376 = vpack.c.bf16 %v1276, %v1271
        %v1377 = vpack.c.bf16 %v1277, %v1272
        %v1378 = vpack.c.bf16 %v1278, %v1273
        %v1379 = vpack.c.bf16 %v1279, %v1274
        %v1380 = vpack.c.bf16 %v1280, %v1275
        %v1381 = vpack.c.bf16 %v1286, %v1281
        %v1382 = vpack.c.bf16 %v1287, %v1282
        %v1383 = vpack.c.bf16 %v1288, %v1283
        %v1384 = vpack.c.bf16 %v1289, %v1284
        %v1385 = vpack.c.bf16 %v1290, %v1285
        %v1386 = vpack.c.bf16 %v1296, %v1291
        %v1387 = vpack.c.bf16 %v1297, %v1292
        %v1388 = vpack.c.bf16 %v1298, %v1293
        %v1389 = vpack.c.bf16 %v1299, %v1294
        %v1390 = vpack.c.bf16 %v1300, %v1295
        %v1391 = vpack.c.bf16 %v1306, %v1301
        %v1392 = vpack.c.bf16 %v1307, %v1302
        %v1393 = vpack.c.bf16 %v1308, %v1303
        %v1394 = vpack.c.bf16 %v1309, %v1304
        %v1395 = vpack.c.bf16 %v1310, %v1305
        %v1396 = vpack.c.bf16 %v1316, %v1311
        %v1397 = vpack.c.bf16 %v1317, %v1312
        %v1398 = vpack.c.bf16 %v1318, %v1313
        %v1399 = vpack.c.bf16 %v1319, %v1314
        %v1400 = vpack.c.bf16 %v1320, %v1315
        %v1401 = vld [vmem:[%s2] sm:$0xff]
        %v1402 = vld [vmem:[%s2 + $0x8] sm:$0xff]
        %v1403 = vld [vmem:[%s2 + $0x10] sm:$0xff]
        %v1404 = vld [vmem:[%s2 + $0x18] sm:$0xff]
        %v1405 = vld [vmem:[%s2 + $0x20] sm:$0xff]
        %v1406 = vld [vmem:[%s2 + $0x28] sm:$0xff]
        %v1407 = vld [vmem:[%s2 + $0x30] sm:$0xff]
        %v1408 = vld [vmem:[%s2 + $0x38] sm:$0xff]
        %v1409 = vld [vmem:[%s2 + $0x40] sm:$0x11]
        %v1410 = vld [vmem:[#allocation2] sm:$0xff]
        %v1411 = vld [vmem:[#allocation2 + $0x8] sm:$0xff]
        %v1412 = vld [vmem:[#allocation2 + $0x10] sm:$0xff]
        %v1413 = vld [vmem:[#allocation2 + $0x18] sm:$0xff]
        %v1414 = vld [vmem:[#allocation2 + $0x20] sm:$0xff]
        %v1415 = vld [vmem:[#allocation2 + $0x28] sm:$0xff]
        %v1416 = vld [vmem:[#allocation2 + $0x30] sm:$0xff]
        %v1417 = vld [vmem:[#allocation2 + $0x38] sm:$0xff]
        %v1418 = vld [vmem:[#allocation2 + $0x40] sm:$0xff]
        %v1419 = vld [vmem:[#allocation2 + $0x48] sm:$0xff]
        %v1420 = vld [vmem:[#allocation2 + $0x50] sm:$0xff]
        %v1421 = vld [vmem:[#allocation2 + $0x58] sm:$0xff]
        %v1422 = vld [vmem:[#allocation2 + $0x60] sm:$0xff]
        %v1423 = vld [vmem:[#allocation2 + $0x68] sm:$0xff]
        %v1424 = vld [vmem:[#allocation2 + $0x70] sm:$0xff]
        %v1425 = vld [vmem:[#allocation2 + $0x78] sm:$0xff]
        %v1426 = vld [vmem:[#allocation2 + $0x80] sm:$0xff]
        %v1427 = vld [vmem:[#allocation2 + $0x88] sm:$0xff]
        %v1428 = vld [vmem:[#allocation2 + $0x90] sm:$0xff]
        %v1429 = vld [vmem:[#allocation2 + $0x98] sm:$0xff]
        %v1430 = vld [vmem:[#allocation2 + $0xa0] sm:$0xff]
        %v1431 = vld [vmem:[#allocation2 + $0xa8] sm:$0xff]
        %v1432 = vld [vmem:[#allocation2 + $0xb0] sm:$0xff]
        %v1433 = vld [vmem:[#allocation2 + $0xb8] sm:$0xff]
        %v1434 = vld [vmem:[#allocation2 + $0xc0] sm:$0xff]
        %v1435 = vld [vmem:[#allocation2 + $0xc8] sm:$0xff]
        %v1436 = vld [vmem:[#allocation2 + $0xd0] sm:$0xff]
        %v1437 = vld [vmem:[#allocation2 + $0xd8] sm:$0xff]
        %v1438 = vld [vmem:[#allocation2 + $0xe0] sm:$0xff]
        %v1439 = vld [vmem:[#allocation2 + $0xe8] sm:$0xff]
        %v1440 = vld [vmem:[#allocation2 + $0xf0] sm:$0xff]
        %v1441 = vld [vmem:[#allocation2 + $0xf8] sm:$0xff]
        %v1442 = vld [vmem:[#allocation2 + $0x100] sm:$0xff]
        %v1443 = vld [vmem:[#allocation2 + $0x108] sm:$0xff]
        %v1444 = vld [vmem:[#allocation2 + $0x110] sm:$0xff]
        %v1445 = vld [vmem:[#allocation2 + $0x118] sm:$0xff]
        %v1446 = vld [vmem:[#allocation2 + $0x120] sm:$0xff]
        %v1447 = vld [vmem:[#allocation2 + $0x128] sm:$0xff]
        %v1448 = vld [vmem:[#allocation2 + $0x130] sm:$0xff]
        %v1449 = vld [vmem:[#allocation2 + $0x138] sm:$0xff]
        %v1450 = vld [vmem:[#allocation2 + $0x140] sm:$0x1]
        %v1451 = vld [vmem:[#allocation2 + $0x148] sm:$0x1]
        %v1452 = vld [vmem:[#allocation2 + $0x150] sm:$0x1]
        %v1453 = vld [vmem:[#allocation2 + $0x158] sm:$0x1]
        %v1454 = vld [vmem:[#allocation2 + $0x160] sm:$0x1]
        %v1464 = vunpack.c.l.b16 %v1401
        %v1465 = vunpack.c.h.b16 %v1401
        %v1466 = vunpack.c.l.b16 %v1402
        %v1467 = vunpack.c.h.b16 %v1402
        %v1468 = vunpack.c.l.b16 %v1403
        %v1469 = vunpack.c.h.b16 %v1403
        %v1470 = vunpack.c.l.b16 %v1404
        %v1471 = vunpack.c.h.b16 %v1404
        %v1472 = vunpack.c.l.b16 %v1405
        %v1473 = vunpack.c.h.b16 %v1405
        %v1474 = vunpack.c.l.b16 %v1406
        %v1475 = vunpack.c.h.b16 %v1406
        %v1476 = vunpack.c.l.b16 %v1407
        %v1477 = vunpack.c.h.b16 %v1407
        %v1478 = vunpack.c.l.b16 %v1408
        %v1479 = vunpack.c.h.b16 %v1408
        %v1480 = vunpack.c.l.b16 %v1409
        %v1481 = vunpack.c.h.b16 %v1409
        %v1482 = vpack.c.b16 %v1466, %v1464
        %v1483 = vpack.c.b16 %v1467, %v1465
        %v1484 = vpack.c.b16 %v1470, %v1468
        %v1485 = vpack.c.b16 %v1471, %v1469
        %v1486 = vpack.c.b16 %v1474, %v1472
        %v1487 = vpack.c.b16 %v1475, %v1473
        %v1488 = vpack.c.b16 %v1478, %v1476
        %v1489 = vpack.c.b16 %v1479, %v1477
        %v1490 = vpack.c.b16 %v1480, %v1480
        %v1491 = vpack.c.b16 %v1481, %v1481
        %1502 = vmatprep.subr.bf16.mxu0 %v1322
        %1503 = vmatpush1.bf16.msra.mxu0 %v1321
        %1504 = vmatprep.subr.bf16.mxu0 %v1327
        %1505 = vmatpush1.bf16.msra.mxu0 %v1326
        %1506 = vmatprep.subr.bf16.mxu0 %v1332
        %1507 = vmatpush1.bf16.msra.mxu0 %v1331
        %1508 = vmatprep.subr.bf16.mxu0 %v1337
        %1509 = vmatpush1.bf16.msra.mxu0 %v1336
        %1510 = vmatprep.subr.bf16.mxu0 %v1342
        %1511 = vmatpush1.bf16.msra.mxu0 %v1341
        %1512 = vmatprep.subr.bf16.mxu0 %v1347
        %1513 = vmatpush1.bf16.msra.mxu0 %v1346
        %1514 = vmatprep.subr.bf16.mxu0 %v1352
        %1515 = vmatpush1.bf16.msra.mxu0 %v1351
        %1516 = vmatprep.subr.bf16.mxu0 %v1357
        %1517 = vmatpush1.bf16.msra.mxu0 %v1356
        %1518 = vmatprep.subr.bf16.mxu0 %v1362
        %1519 = vmatpush1.bf16.msra.mxu0 %v1361
        %1520 = vmatprep.subr.bf16.mxu0 %v1367
        %1521 = vmatpush1.bf16.msra.mxu0 %v1366
        %1522 = vmatprep.subr.bf16.mxu0 %v1372
        %1523 = vmatpush1.bf16.msra.mxu0 %v1371
        %1524 = vmatprep.subr.bf16.mxu0 %v1377
        %1525 = vmatpush1.bf16.msra.mxu0 %v1376
        %1526 = vmatprep.subr.bf16.mxu0 %v1382
        %1527 = vmatpush1.bf16.msra.mxu0 %v1381
        %1528 = vmatprep.subr.bf16.mxu0 %v1387
        %1529 = vmatpush1.bf16.msra.mxu0 %v1386
        %1530 = vmatprep.subr.bf16.mxu0 %v1392
        %1531 = vmatpush1.bf16.msra.mxu0 %v1391
        %1532 = vmatprep.subr.bf16.mxu0 %v1397
        %1533 = vmatpush1.bf16.msra.mxu0 %v1396
        %1534 = vmatprep.mubr.bf16.mxu0 %v1483
        %1535 = vmatmul.mubr.bf16.gmra.mrb[0].mxu0 %v1482
        %v1536 = vpop.f32.mrb[0].mxu0
        %v1537 = vadd.f32 0.0, %v1536
        %v1538 = vpop.f32.mrb[0].mxu0
        %v1539 = vadd.f32 0.0, %v1538
        %v1540 = vpop.f32.mrb[0].mxu0
        %v1541 = vadd.f32 0.0, %v1540
        %v1542 = vpop.f32.mrb[0].mxu0
        %v1543 = vadd.f32 0.0, %v1542
        %1544 = vmatprep.mubr.bf16.mxu0 %v1485
        %1545 = vmatmul.mubr.bf16.gmra.mrb[0].mxu0 %v1484
        %v1546 = vpop.f32.mrb[0].mxu0
        %v1547 = vadd.f32 0.0, %v1546
        %v1548 = vpop.f32.mrb[0].mxu0
        %v1549 = vadd.f32 0.0, %v1548
        %v1550 = vpop.f32.mrb[0].mxu0
        %v1551 = vadd.f32 0.0, %v1550
        %v1552 = vpop.f32.mrb[0].mxu0
        %v1553 = vadd.f32 0.0, %v1552
        %1554 = vmatprep.mubr.bf16.mxu0 %v1487
        %1555 = vmatmul.mubr.bf16.gmra.mrb[0].mxu0 %v1486
        %v1556 = vpop.f32.mrb[0].mxu0
        %v1557 = vadd.f32 0.0, %v1556
        %v1558 = vpop.f32.mrb[0].mxu0
        %v1559 = vadd.f32 0.0, %v1558
        %v1560 = vpop.f32.mrb[0].mxu0
        %v1561 = vadd.f32 0.0, %v1560
        %v1562 = vpop.f32.mrb[0].mxu0
        %v1563 = vadd.f32 0.0, %v1562
        %1564 = vmatprep.mubr.bf16.mxu0 %v1489
        %1565 = vmatmul.mubr.bf16.gmra.mrb[0].mxu0 %v1488
        %v1566 = vpop.f32.mrb[0].mxu0
        %v1567 = vadd.f32 0.0, %v1566
        %v1568 = vpop.f32.mrb[0].mxu0
        %v1569 = vadd.f32 0.0, %v1568
        %v1570 = vpop.f32.mrb[0].mxu0
        %v1571 = vadd.f32 0.0, %v1570
        %v1572 = vpop.f32.mrb[0].mxu0
        %v1573 = vadd.f32 0.0, %v1572
        %1574 = vmatprep.mubr.bf16.mxu0 %v1491
        %1575 = vmatmul.mubr.bf16.gmra.mrb[0].mxu0 %v1490
        %v1576 = vpop.f32.mrb[0].mxu0
        %v1577 = vadd.f32 0.0, %v1576
        %v1578 = vpop.f32.mrb[0].mxu0
        %v1579 = vadd.f32 0.0, %v1578
        %v1580 = vpop.f32.mrb[0].mxu0
        %v1581 = vpop.f32.mrb[0].mxu0
        %1582 = vdwg.mxu0
        %1583 = vmatprep.subr.bf16.mxu0 %v1324
        %1584 = vmatpush1.bf16.msra.mxu0 %v1323
        %1585 = vmatprep.subr.bf16.mxu0 %v1329
        %1586 = vmatpush1.bf16.msra.mxu0 %v1328
        %1587 = vmatprep.subr.bf16.mxu0 %v1334
        %1588 = vmatpush1.bf16.msra.mxu0 %v1333
        %1589 = vmatprep.subr.bf16.mxu0 %v1339
        %1590 = vmatpush1.bf16.msra.mxu0 %v1338
        %1591 = vmatprep.subr.bf16.mxu0 %v1344
        %1592 = vmatpush1.bf16.msra.mxu0 %v1343
        %1593 = vmatprep.subr.bf16.mxu0 %v1349
        %1594 = vmatpush1.bf16.msra.mxu0 %v1348
        %1595 = vmatprep.subr.bf16.mxu0 %v1354
        %1596 = vmatpush1.bf16.msra.mxu0 %v1353
        %1597 = vmatprep.subr.bf16.mxu0 %v1359
        %1598 = vmatpush1.bf16.msra.mxu0 %v1358
        %1599 = vmatprep.subr.bf16.mxu0 %v1364
        %1600 = vmatpush1.bf16.msra.mxu0 %v1363
        %1601 = vmatprep.subr.bf16.mxu0 %v1369
        %1602 = vmatpush1.bf16.msra.mxu0 %v1368
        %1603 = vmatprep.subr.bf16.mxu0 %v1374
        %1604 = vmatpush1.bf16.msra.mxu0 %v1373
        %1605 = vmatprep.subr.bf16.mxu0 %v1379
        %1606 = vmatpush1.bf16.msra.mxu0 %v1378
        %1607 = vmatprep.subr.bf16.mxu0 %v1384
        %1608 = vmatpush1.bf16.msra.mxu0 %v1383
        %1609 = vmatprep.subr.bf16.mxu0 %v1389
        %1610 = vmatpush1.bf16.msra.mxu0 %v1388
        %1611 = vmatprep.subr.bf16.mxu0 %v1394
        %1612 = vmatpush1.bf16.msra.mxu0 %v1393
        %1613 = vmatprep.subr.bf16.mxu0 %v1399
        %1614 = vmatpush1.bf16.msra.mxu0 %v1398
        %1615 = vmatprep.mubr.bf16.mxu0 %v1483
        %1616 = vmatmul.mubr.bf16.gmra.mrb[0].mxu0 %v1482
        %v1617 = vpop.f32.mrb[0].mxu0
        %v1618 = vadd.f32 0.0, %v1617
        %v1619 = vpop.f32.mrb[0].mxu0
        %v1620 = vadd.f32 0.0, %v1619
        %v1621 = vpop.f32.mrb[0].mxu0
        %v1622 = vadd.f32 0.0, %v1621
        %v1623 = vpop.f32.mrb[0].mxu0
        %v1624 = vadd.f32 0.0, %v1623
        %1625 = vmatprep.mubr.bf16.mxu0 %v1485
        %1626 = vmatmul.mubr.bf16.gmra.mrb[0].mxu0 %v1484
        %v1627 = vpop.f32.mrb[0].mxu0
        %v1628 = vadd.f32 0.0, %v1627
        %v1629 = vpop.f32.mrb[0].mxu0
        %v1630 = vadd.f32 0.0, %v1629
        %v1631 = vpop.f32.mrb[0].mxu0
        %v1632 = vadd.f32 0.0, %v1631
        %v1633 = vpop.f32.mrb[0].mxu0
        %v1634 = vadd.f32 0.0, %v1633
        %1635 = vmatprep.mubr.bf16.mxu0 %v1487
        %1636 = vmatmul.mubr.bf16.gmra.mrb[0].mxu0 %v1486
        %v1637 = vpop.f32.mrb[0].mxu0
        %v1638 = vadd.f32 0.0, %v1637
        %v1639 = vpop.f32.mrb[0].mxu0
        %v1640 = vadd.f32 0.0, %v1639
        %v1641 = vpop.f32.mrb[0].mxu0
        %v1642 = vadd.f32 0.0, %v1641
        %v1643 = vpop.f32.mrb[0].mxu0
        %v1644 = vadd.f32 0.0, %v1643
        %1645 = vmatprep.mubr.bf16.mxu0 %v1489
        %1646 = vmatmul.mubr.bf16.gmra.mrb[0].mxu0 %v1488
        %v1647 = vpop.f32.mrb[0].mxu0
        %v1648 = vadd.f32 0.0, %v1647
        %v1649 = vpop.f32.mrb[0].mxu0
        %v1650 = vadd.f32 0.0, %v1649
        %v1651 = vpop.f32.mrb[0].mxu0
        %v1652 = vadd.f32 0.0, %v1651
        %v1653 = vpop.f32.mrb[0].mxu0
        %v1654 = vadd.f32 0.0, %v1653
        %1655 = vmatprep.mubr.bf16.mxu0 %v1491
        %1656 = vmatmul.mubr.bf16.gmra.mrb[0].mxu0 %v1490
        %v1657 = vpop.f32.mrb[0].mxu0
        %v1658 = vadd.f32 0.0, %v1657
        %v1659 = vpop.f32.mrb[0].mxu0
        %v1660 = vadd.f32 0.0, %v1659
        %v1661 = vpop.f32.mrb[0].mxu0
        %v1662 = vpop.f32.mrb[0].mxu0
        %1663 = vdwg.mxu0
        %1664 = vmatprep.subr.bf16.mxu0 0
        %1665 = vmatpush1.bf16.msra.mxu0 %v1325
        %1666 = vmatprep.subr.bf16.mxu0 0
        %1667 = vmatpush1.bf16.msra.mxu0 %v1330
        %1668 = vmatprep.subr.bf16.mxu0 0
        %1669 = vmatpush1.bf16.msra.mxu0 %v1335
        %1670 = vmatprep.subr.bf16.mxu0 0
        %1671 = vmatpush1.bf16.msra.mxu0 %v1340
        %1672 = vmatprep.subr.bf16.mxu0 0
        %1673 = vmatpush1.bf16.msra.mxu0 %v1345
        %1674 = vmatprep.subr.bf16.mxu0 0
        %1675 = vmatpush1.bf16.msra.mxu0 %v1350
        %1676 = vmatprep.subr.bf16.mxu0 0
        %1677 = vmatpush1.bf16.msra.mxu0 %v1355
        %1678 = vmatprep.subr.bf16.mxu0 0
        %1679 = vmatpush1.bf16.msra.mxu0 %v1360
        %1680 = vmatprep.subr.bf16.mxu0 0
        %1681 = vmatpush1.bf16.msra.mxu0 %v1365
        %1682 = vmatprep.subr.bf16.mxu0 0
        %1683 = vmatpush1.bf16.msra.mxu0 %v1370
        %1684 = vmatprep.subr.bf16.mxu0 0
        %1685 = vmatpush1.bf16.msra.mxu0 %v1375
        %1686 = vmatprep.subr.bf16.mxu0 0
        %1687 = vmatpush1.bf16.msra.mxu0 %v1380
        %1688 = vmatprep.subr.bf16.mxu0 0
        %1689 = vmatpush1.bf16.msra.mxu0 %v1385
        %1690 = vmatprep.subr.bf16.mxu0 0
        %1691 = vmatpush1.bf16.msra.mxu0 %v1390
        %1692 = vmatprep.subr.bf16.mxu0 0
        %1693 = vmatpush1.bf16.msra.mxu0 %v1395
        %1694 = vmatprep.subr.bf16.mxu0 0
        %1695 = vmatpush1.bf16.msra.mxu0 %v1400
        %1696 = vmatprep.mubr.bf16.mxu0 %v1483
        %1697 = vmatmul.mubr.bf16.gmra.mrb[0].mxu0 %v1482
        %v1698 = vpop.f32.mrb[0].mxu0
        %v1699 = vadd.f32 0.0, %v1698
        %v1700 = vpop.f32.mrb[0].mxu0
        %v1701 = vpop.f32.mrb[0].mxu0
        %v1702 = vadd.f32 0.0, %v1701
        %v1703 = vpop.f32.mrb[0].mxu0
        %1704 = vmatprep.mubr.bf16.mxu0 %v1485
        %1705 = vmatmul.mubr.bf16.gmra.mrb[0].mxu0 %v1484
        %v1706 = vpop.f32.mrb[0].mxu0
        %v1707 = vadd.f32 0.0, %v1706
        %v1708 = vpop.f32.mrb[0].mxu0
        %v1709 = vpop.f32.mrb[0].mxu0
        %v1710 = vadd.f32 0.0, %v1709
        %v1711 = vpop.f32.mrb[0].mxu0
        %1712 = vmatprep.mubr.bf16.mxu0 %v1487
        %1713 = vmatmul.mubr.bf16.gmra.mrb[0].mxu0 %v1486
        %v1714 = vpop.f32.mrb[0].mxu0
        %v1715 = vadd.f32 0.0, %v1714
        %v1716 = vpop.f32.mrb[0].mxu0
        %v1717 = vpop.f32.mrb[0].mxu0
        %v1718 = vadd.f32 0.0, %v1717
        %v1719 = vpop.f32.mrb[0].mxu0
        %1720 = vmatprep.mubr.bf16.mxu0 %v1489
        %1721 = vmatmul.mubr.bf16.gmra.mrb[0].mxu0 %v1488
        %v1722 = vpop.f32.mrb[0].mxu0
        %v1723 = vadd.f32 0.0, %v1722
        %v1724 = vpop.f32.mrb[0].mxu0
        %v1725 = vpop.f32.mrb[0].mxu0
        %v1726 = vadd.f32 0.0, %v1725
        %v1727 = vpop.f32.mrb[0].mxu0
        %1728 = vmatprep.mubr.bf16.mxu0 %v1491
        %1729 = vmatmul.mubr.bf16.gmra.mrb[0].mxu0 %v1490
        %v1730 = vpop.f32.mrb[0].mxu0
        %v1731 = vadd.f32 0.0, %v1730
        %v1732 = vpop.f32.mrb[0].mxu0
        %v1733 = vpop.f32.mrb[0].mxu0
        %v1734 = vpop.f32.mrb[0].mxu0
        %1735 = vdwg.mxu0
        %v1736 = vadd.f32 %v1410, %v1537
        %v1737 = vadd.f32 %v1411, %v1539
        %v1738 = vadd.f32 %v1412, %v1618
        %v1739 = vadd.f32 %v1413, %v1620
        %v1740 = vadd.f32 %v1414, %v1699
        %v1741 = vadd.f32 %v1415, %v1541
        %v1742 = vadd.f32 %v1416, %v1543
        %v1743 = vadd.f32 %v1417, %v1622
        %v1744 = vadd.f32 %v1418, %v1624
        %v1745 = vadd.f32 %v1419, %v1702
        %v1746 = vadd.f32 %v1420, %v1547
        %v1747 = vadd.f32 %v1421, %v1549
        %v1748 = vadd.f32 %v1422, %v1628
        %v1749 = vadd.f32 %v1423, %v1630
        %v1750 = vadd.f32 %v1424, %v1707
        %v1751 = vadd.f32 %v1425, %v1551
        %v1752 = vadd.f32 %v1426, %v1553
        %v1753 = vadd.f32 %v1427, %v1632
        %v1754 = vadd.f32 %v1428, %v1634
        %v1755 = vadd.f32 %v1429, %v1710
        %v1756 = vadd.f32 %v1430, %v1557
        %v1757 = vadd.f32 %v1431, %v1559
        %v1758 = vadd.f32 %v1432, %v1638
        %v1759 = vadd.f32 %v1433, %v1640
        %v1760 = vadd.f32 %v1434, %v1715
        %v1761 = vadd.f32 %v1435, %v1561
        %v1762 = vadd.f32 %v1436, %v1563
        %v1763 = vadd.f32 %v1437, %v1642
        %v1764 = vadd.f32 %v1438, %v1644
        %v1765 = vadd.f32 %v1439, %v1718
        %v1766 = vadd.f32 %v1440, %v1567
        %v1767 = vadd.f32 %v1441, %v1569
        %v1768 = vadd.f32 %v1442, %v1648
        %v1769 = vadd.f32 %v1443, %v1650
        %v1770 = vadd.f32 %v1444, %v1723
        %v1771 = vadd.f32 %v1445, %v1571
        %v1772 = vadd.f32 %v1446, %v1573
        %v1773 = vadd.f32 %v1447, %v1652
        %v1774 = vadd.f32 %v1448, %v1654
        %v1775 = vadd.f32 %v1449, %v1726
        %v1776 = vadd.f32 %v1450, %v1577
        %v1777 = vadd.f32 %v1451, %v1579
        %v1778 = vadd.f32 %v1452, %v1658
        %v1779 = vadd.f32 %v1453, %v1660
        %v1780 = vadd.f32 %v1454, %v1731
        %1781 = vst [vmem:[#allocation2] sm:$0xff] %v1736
        %1782 = vst [vmem:[#allocation2 + $0x8] sm:$0xff] %v1737
        %1783 = vst [vmem:[#allocation2 + $0x10] sm:$0xff] %v1738
        %1784 = vst [vmem:[#allocation2 + $0x18] sm:$0xff] %v1739
        %1785 = vst [vmem:[#allocation2 + $0x20] sm:$0xff] %v1740
        %1786 = vst [vmem:[#allocation2 + $0x28] sm:$0xff] %v1741
        %1787 = vst [vmem:[#allocation2 + $0x30] sm:$0xff] %v1742
        %1788 = vst [vmem:[#allocation2 + $0x38] sm:$0xff] %v1743
        %1789 = vst [vmem:[#allocation2 + $0x40] sm:$0xff] %v1744
        %1790 = vst [vmem:[#allocation2 + $0x48] sm:$0xff] %v1745
        %1791 = vst [vmem:[#allocation2 + $0x50] sm:$0xff] %v1746
        %1792 = vst [vmem:[#allocation2 + $0x58] sm:$0xff] %v1747
        %1793 = vst [vmem:[#allocation2 + $0x60] sm:$0xff] %v1748
        %1794 = vst [vmem:[#allocation2 + $0x68] sm:$0xff] %v1749
        %1795 = vst [vmem:[#allocation2 + $0x70] sm:$0xff] %v1750
        %1796 = vst [vmem:[#allocation2 + $0x78] sm:$0xff] %v1751
        %1797 = vst [vmem:[#allocation2 + $0x80] sm:$0xff] %v1752
        %1798 = vst [vmem:[#allocation2 + $0x88] sm:$0xff] %v1753
        %1799 = vst [vmem:[#allocation2 + $0x90] sm:$0xff] %v1754
        %1800 = vst [vmem:[#allocation2 + $0x98] sm:$0xff] %v1755
        %1801 = vst [vmem:[#allocation2 + $0xa0] sm:$0xff] %v1756
        %1802 = vst [vmem:[#allocation2 + $0xa8] sm:$0xff] %v1757
        %1803 = vst [vmem:[#allocation2 + $0xb0] sm:$0xff] %v1758
        %1804 = vst [vmem:[#allocation2 + $0xb8] sm:$0xff] %v1759
        %1805 = vst [vmem:[#allocation2 + $0xc0] sm:$0xff] %v1760
        %1806 = vst [vmem:[#allocation2 + $0xc8] sm:$0xff] %v1761
        %1807 = vst [vmem:[#allocation2 + $0xd0] sm:$0xff] %v1762
        %1808 = vst [vmem:[#allocation2 + $0xd8] sm:$0xff] %v1763
        %1809 = vst [vmem:[#allocation2 + $0xe0] sm:$0xff] %v1764
        %1810 = vst [vmem:[#allocation2 + $0xe8] sm:$0xff] %v1765
        %1811 = vst [vmem:[#allocation2 + $0xf0] sm:$0xff] %v1766
        %1812 = vst [vmem:[#allocation2 + $0xf8] sm:$0xff] %v1767
        %1813 = vst [vmem:[#allocation2 + $0x100] sm:$0xff] %v1768
        %1814 = vst [vmem:[#allocation2 + $0x108] sm:$0xff] %v1769
        %1815 = vst [vmem:[#allocation2 + $0x110] sm:$0xff] %v1770
        %1816 = vst [vmem:[#allocation2 + $0x118] sm:$0xff] %v1771
        %1817 = vst [vmem:[#allocation2 + $0x120] sm:$0xff] %v1772
        %1818 = vst [vmem:[#allocation2 + $0x128] sm:$0xff] %v1773
        %1819 = vst [vmem:[#allocation2 + $0x130] sm:$0xff] %v1774
        %1820 = vst [vmem:[#allocation2 + $0x138] sm:$0xff] %v1775
        %1821 = vst [vmem:[#allocation2 + $0x140] sm:$0x1] %v1776
        %1822 = vst [vmem:[#allocation2 + $0x148] sm:$0x1] %v1777
        %1823 = vst [vmem:[#allocation2 + $0x150] sm:$0x1] %v1778
        %1824 = vst [vmem:[#allocation2 + $0x158] sm:$0x1] %v1779
        %1825 = vst [vmem:[#allocation2 + $0x160] sm:$0x1] %v1780
        %v1826 = vld [vmem:[#allocation2] sm:$0xff]
        %v1827 = vld [vmem:[#allocation2 + $0x8] sm:$0xff]
        %v1828 = vld [vmem:[#allocation2 + $0x10] sm:$0xff]
        %v1829 = vld [vmem:[#allocation2 + $0x18] sm:$0xff]
        %v1830 = vld [vmem:[#allocation2 + $0x20] sm:$0xff]
        %v1831 = vld [vmem:[#allocation2 + $0x28] sm:$0xff]
        %v1832 = vld [vmem:[#allocation2 + $0x30] sm:$0xff]
        %v1833 = vld [vmem:[#allocation2 + $0x38] sm:$0xff]
        %v1834 = vld [vmem:[#allocation2 + $0x40] sm:$0xff]
        %v1835 = vld [vmem:[#allocation2 + $0x48] sm:$0xff]
        %v1836 = vld [vmem:[#allocation2 + $0x50] sm:$0xff]
        %v1837 = vld [vmem:[#allocation2 + $0x58] sm:$0xff]
        %v1838 = vld [vmem:[#allocation2 + $0x60] sm:$0xff]
        %v1839 = vld [vmem:[#allocation2 + $0x68] sm:$0xff]
        %v1840 = vld [vmem:[#allocation2 + $0x70] sm:$0xff]
        %v1841 = vld [vmem:[#allocation2 + $0x78] sm:$0xff]
        %v1842 = vld [vmem:[#allocation2 + $0x80] sm:$0xff]
        %v1843 = vld [vmem:[#allocation2 + $0x88] sm:$0xff]
        %v1844 = vld [vmem:[#allocation2 + $0x90] sm:$0xff]
        %v1845 = vld [vmem:[#allocation2 + $0x98] sm:$0xff]
        %v1846 = vld [vmem:[#allocation2 + $0xa0] sm:$0xff]
        %v1847 = vld [vmem:[#allocation2 + $0xa8] sm:$0xff]
        %v1848 = vld [vmem:[#allocation2 + $0xb0] sm:$0xff]
        %v1849 = vld [vmem:[#allocation2 + $0xb8] sm:$0xff]
        %v1850 = vld [vmem:[#allocation2 + $0xc0] sm:$0xff]
        %v1851 = vld [vmem:[#allocation2 + $0xc8] sm:$0xff]
        %v1852 = vld [vmem:[#allocation2 + $0xd0] sm:$0xff]
        %v1853 = vld [vmem:[#allocation2 + $0xd8] sm:$0xff]
        %v1854 = vld [vmem:[#allocation2 + $0xe0] sm:$0xff]
        %v1855 = vld [vmem:[#allocation2 + $0xe8] sm:$0xff]
        %v1856 = vld [vmem:[#allocation2 + $0xf0] sm:$0xff]
        %v1857 = vld [vmem:[#allocation2 + $0xf8] sm:$0xff]
        %v1858 = vld [vmem:[#allocation2 + $0x100] sm:$0xff]
        %v1859 = vld [vmem:[#allocation2 + $0x108] sm:$0xff]
        %v1860 = vld [vmem:[#allocation2 + $0x110] sm:$0xff]
        %v1861 = vld [vmem:[#allocation2 + $0x118] sm:$0xff]
        %v1862 = vld [vmem:[#allocation2 + $0x120] sm:$0xff]
        %v1863 = vld [vmem:[#allocation2 + $0x128] sm:$0xff]
        %v1864 = vld [vmem:[#allocation2 + $0x130] sm:$0xff]
        %v1865 = vld [vmem:[#allocation2 + $0x138] sm:$0xff]
        %v1866 = vld [vmem:[#allocation2 + $0x140] sm:$0x1]
        %v1867 = vld [vmem:[#allocation2 + $0x148] sm:$0x1]
        %v1868 = vld [vmem:[#allocation2 + $0x150] sm:$0x1]
        %v1869 = vld [vmem:[#allocation2 + $0x158] sm:$0x1]
        %v1870 = vld [vmem:[#allocation2 + $0x160] sm:$0x1]
        %v1871 = vadd.f32 %v1866, 1e-08
        %v1872 = vadd.f32 %v1867, 1e-08
        %v1873 = vadd.f32 %v1868, 1e-08
        %v1874 = vadd.f32 %v1869, 1e-08
        %v1875 = vadd.f32 %v1870, 1e-08
        %v1876 = vrcp.pop %v1871
        %v1877 = vrcp.pop %v1872
        %v1878 = vrcp.pop %v1873
        %v1879 = vrcp.pop %v1874
        %v1880 = vrcp.pop %v1875
        %v1881 = vlaneseq
        %v1882 = vshrl.u32 %v1881, 7
        %v1883 = vsub.s32 0, %v1882
        %v1884 = vrot.slane %v1876, %v1883
        %v1885 = vlaneseq
        %v1886 = vshrl.u32 %v1885, 7
        %v1887 = vsub.s32 0, %v1886
        %v1888 = vrot.slane %v1877, %v1887
        %v1889 = vlaneseq
        %v1890 = vshrl.u32 %v1889, 7
        %v1891 = vsub.s32 0, %v1890
        %v1892 = vrot.slane %v1878, %v1891
        %v1893 = vlaneseq
        %v1894 = vshrl.u32 %v1893, 7
        %v1895 = vsub.s32 0, %v1894
        %v1896 = vrot.slane %v1879, %v1895
        %v1897 = vlaneseq
        %v1898 = vshrl.u32 %v1897, 7
        %v1899 = vsub.s32 0, %v1898
        %v1900 = vrot.slane %v1880, %v1899
        %v1901 = vmul.f32 %v1826, %v1884
        %v1902 = vmul.f32 %v1827, %v1888
        %v1903 = vmul.f32 %v1828, %v1892
        %v1904 = vmul.f32 %v1829, %v1896
        %v1905 = vmul.f32 %v1830, %v1900
        %v1906 = vmul.f32 %v1831, %v1884
        %v1907 = vmul.f32 %v1832, %v1888
        %v1908 = vmul.f32 %v1833, %v1892
        %v1909 = vmul.f32 %v1834, %v1896
        %v1910 = vmul.f32 %v1835, %v1900
        %v1911 = vmul.f32 %v1836, %v1884
        %v1912 = vmul.f32 %v1837, %v1888
        %v1913 = vmul.f32 %v1838, %v1892
        %v1914 = vmul.f32 %v1839, %v1896
        %v1915 = vmul.f32 %v1840, %v1900
        %v1916 = vmul.f32 %v1841, %v1884
        %v1917 = vmul.f32 %v1842, %v1888
        %v1918 = vmul.f32 %v1843, %v1892
        %v1919 = vmul.f32 %v1844, %v1896
        %v1920 = vmul.f32 %v1845, %v1900
        %v1921 = vmul.f32 %v1846, %v1884
        %v1922 = vmul.f32 %v1847, %v1888
        %v1923 = vmul.f32 %v1848, %v1892
        %v1924 = vmul.f32 %v1849, %v1896
        %v1925 = vmul.f32 %v1850, %v1900
        %v1926 = vmul.f32 %v1851, %v1884
        %v1927 = vmul.f32 %v1852, %v1888
        %v1928 = vmul.f32 %v1853, %v1892
        %v1929 = vmul.f32 %v1854, %v1896
        %v1930 = vmul.f32 %v1855, %v1900
        %v1931 = vmul.f32 %v1856, %v1884
        %v1932 = vmul.f32 %v1857, %v1888
        %v1933 = vmul.f32 %v1858, %v1892
        %v1934 = vmul.f32 %v1859, %v1896
        %v1935 = vmul.f32 %v1860, %v1900
        %v1936 = vmul.f32 %v1861, %v1884
        %v1937 = vmul.f32 %v1862, %v1888
        %v1938 = vmul.f32 %v1863, %v1892
        %v1939 = vmul.f32 %v1864, %v1896
        %v1940 = vmul.f32 %v1865, %v1900
        %v1941 = vmax.f32 %v1901, 0.0
        %v1942 = vmax.f32 %v1902, 0.0
        %v1943 = vmax.f32 %v1903, 0.0
        %v1944 = vmax.f32 %v1904, 0.0
        %v1945 = vmax.f32 %v1905, 0.0
        %v1946 = vmax.f32 %v1906, 0.0
        %v1947 = vmax.f32 %v1907, 0.0
        %v1948 = vmax.f32 %v1908, 0.0
        %v1949 = vmax.f32 %v1909, 0.0
        %v1950 = vmax.f32 %v1910, 0.0
        %v1951 = vmax.f32 %v1911, 0.0
        %v1952 = vmax.f32 %v1912, 0.0
        %v1953 = vmax.f32 %v1913, 0.0
        %v1954 = vmax.f32 %v1914, 0.0
        %v1955 = vmax.f32 %v1915, 0.0
        %v1956 = vmax.f32 %v1916, 0.0
        %v1957 = vmax.f32 %v1917, 0.0
        %v1958 = vmax.f32 %v1918, 0.0
        %v1959 = vmax.f32 %v1919, 0.0
        %v1960 = vmax.f32 %v1920, 0.0
        %v1961 = vmax.f32 %v1921, 0.0
        %v1962 = vmax.f32 %v1922, 0.0
        %v1963 = vmax.f32 %v1923, 0.0
        %v1964 = vmax.f32 %v1924, 0.0
        %v1965 = vmax.f32 %v1925, 0.0
        %v1966 = vmax.f32 %v1926, 0.0
        %v1967 = vmax.f32 %v1927, 0.0
        %v1968 = vmax.f32 %v1928, 0.0
        %v1969 = vmax.f32 %v1929, 0.0
        %v1970 = vmax.f32 %v1930, 0.0
        %v1971 = vmax.f32 %v1931, 0.0
        %v1972 = vmax.f32 %v1932, 0.0
        %v1973 = vmax.f32 %v1933, 0.0
        %v1974 = vmax.f32 %v1934, 0.0
        %v1975 = vmax.f32 %v1935, 0.0
        %v1976 = vmax.f32 %v1936, 0.0
        %v1977 = vmax.f32 %v1937, 0.0
        %v1978 = vmax.f32 %v1938, 0.0
        %v1979 = vmax.f32 %v1939, 0.0
        %v1980 = vmax.f32 %v1940, 0.0
        %v1981 = vld [vmem:[%s3] sm:$0xff]
        %v1982 = vld [vmem:[%s3 + $0x8] sm:$0xff]
        %v1983 = vld [vmem:[%s3 + $0x10] sm:$0xff]
        %v1984 = vld [vmem:[%s3 + $0x18] sm:$0xff]
        %v1985 = vld [vmem:[%s3 + $0x20] sm:$0xff]
        %v1986 = vld [vmem:[%s3 + $0x28] sm:$0xff]
        %v1987 = vld [vmem:[%s3 + $0x30] sm:$0xff]
        %v1988 = vld [vmem:[%s3 + $0x38] sm:$0xff]
        %vm1989 = vcmask 523264
        %v1991 = vsel %vm1989, %v1981, 0
        %v1994 = vsel %vm1989, %v1982, 0
        %v1997 = vsel %vm1989, %v1983, 0
        %v2000 = vsel %vm1989, %v1984, 0
        %v2003 = vsel %vm1989, %v1985, 0
        %v2006 = vsel %vm1989, %v1986, 0
        %v2009 = vsel %vm1989, %v1987, 0
        %v2012 = vsel %vm1989, %v1988, 0
        %2014 = vmatprep.subr.mxu0 %v1942
        %2015 = vmatpush1.msra.mxu0 %v1941
        %2016 = vmatprep.subr.mxu0 %v1947
        %2017 = vmatpush1.msra.mxu0 %v1946
        %2018 = vmatprep.subr.mxu0 %v1952
        %2019 = vmatpush1.msra.mxu0 %v1951
        %2020 = vmatprep.subr.mxu0 %v1957
        %2021 = vmatpush1.msra.mxu0 %v1956
        %2022 = vmatprep.subr.mxu0 %v1962
        %2023 = vmatpush1.msra.mxu0 %v1961
        %2024 = vmatprep.subr.mxu0 %v1967
        %2025 = vmatpush1.msra.mxu0 %v1966
        %2026 = vmatprep.subr.mxu0 %v1972
        %2027 = vmatpush1.msra.mxu0 %v1971
        %2028 = vmatprep.subr.mxu0 %v1977
        %2029 = vmatpush1.msra.mxu0 %v1976
        %2030 = vmatprep.subr.mxu0 0.0
        %2031 = vmatpush1.msra.mxu0 0.0
        %2032 = vmatprep.subr.mxu0 0.0
        %2033 = vmatpush1.msra.mxu0 0.0
        %2034 = vmatprep.subr.mxu0 0.0
        %2035 = vmatpush1.msra.mxu0 0.0
        %2036 = vmatprep.subr.mxu0 0.0
        %2037 = vmatpush1.msra.mxu0 0.0
        %2038 = vmatprep.subr.mxu0 0.0
        %2039 = vmatpush1.msra.mxu0 0.0
        %2040 = vmatprep.subr.mxu0 0.0
        %2041 = vmatpush1.msra.mxu0 0.0
        %2042 = vmatprep.subr.mxu0 0.0
        %2043 = vmatpush1.msra.mxu0 0.0
        %2044 = vmatprep.subr.mxu0 0.0
        %2045 = vmatpush1.msra.mxu0 0.0
        %2046 = vmatprep.subr.mxu0 0.0
        %2047 = vmatpush1.msra.mxu0 0.0
        %2048 = vmatprep.subr.mxu0 0.0
        %2049 = vmatpush1.msra.mxu0 0.0
        %2050 = vmatprep.subr.mxu0 0.0
        %2051 = vmatpush1.msra.mxu0 0.0
        %2052 = vmatprep.subr.mxu0 0.0
        %2053 = vmatpush1.msra.mxu0 0.0
        %2054 = vmatprep.subr.mxu0 0.0
        %2055 = vmatpush1.msra.mxu0 0.0
        %2056 = vmatprep.subr.mxu0 0.0
        %2057 = vmatpush1.msra.mxu0 0.0
        %2058 = vmatprep.subr.mxu0 0.0
        %2059 = vmatpush1.msra.mxu0 0.0
        %2060 = vmatprep.subr.mxu0 0.0
        %2061 = vmatpush1.msra.mxu0 0.0
        %2062 = vmatprep.subr.mxu0 0.0
        %2063 = vmatpush1.msra.mxu0 0.0
        %2064 = vmatprep.subr.mxu0 0.0
        %2065 = vmatpush1.msra.mxu0 0.0
        %2066 = vmatprep.subr.mxu0 0.0
        %2067 = vmatpush1.msra.mxu0 0.0
        %2068 = vmatprep.subr.mxu0 0.0
        %2069 = vmatpush1.msra.mxu0 0.0
        %2070 = vmatprep.subr.mxu0 0.0
        %2071 = vmatpush1.msra.mxu0 0.0
        %2072 = vmatprep.subr.mxu0 0.0
        %2073 = vmatpush1.msra.mxu0 0.0
        %2074 = vmatprep.subr.mxu0 0.0
        %2075 = vmatpush1.msra.mxu0 0.0
        %2076 = vmatprep.subr.mxu0 0.0
        %2077 = vmatpush1.msra.mxu0 0.0
        %2078 = vmatprep.mubr.f32.mxu0 0.0
        %2079 = vmatmul.mubr.f32.gmra.mrb[0].mxu0 %v1991
        %v2080 = vpop.f32.mrb[0].mxu0
        %v2081 = vadd.f32 0.0, %v2080
        %v2082 = vpop.f32.mrb[0].mxu0
        %v2083 = vadd.f32 0.0, %v2082
        %2084 = vmatprep.mubr.f32.mxu0 0.0
        %2085 = vmatmul.mubr.f32.gmra.mrb[0].mxu0 %v1994
        %v2086 = vpop.f32.mrb[0].mxu0
        %v2087 = vadd.f32 0.0, %v2086
        %v2088 = vpop.f32.mrb[0].mxu0
        %v2089 = vadd.f32 0.0, %v2088
        %2090 = vmatprep.mubr.f32.mxu0 0.0
        %2091 = vmatmul.mubr.f32.gmra.mrb[0].mxu0 %v1997
        %v2092 = vpop.f32.mrb[0].mxu0
        %v2093 = vadd.f32 0.0, %v2092
        %v2094 = vpop.f32.mrb[0].mxu0
        %v2095 = vadd.f32 0.0, %v2094
        %2096 = vmatprep.mubr.f32.mxu0 0.0
        %2097 = vmatmul.mubr.f32.gmra.mrb[0].mxu0 %v2000
        %v2098 = vpop.f32.mrb[0].mxu0
        %v2099 = vadd.f32 0.0, %v2098
        %v2100 = vpop.f32.mrb[0].mxu0
        %v2101 = vadd.f32 0.0, %v2100
        %2102 = vmatprep.mubr.f32.mxu0 0.0
        %2103 = vmatmul.mubr.f32.gmra.mrb[0].mxu0 %v2003
        %v2104 = vpop.f32.mrb[0].mxu0
        %v2105 = vadd.f32 0.0, %v2104
        %v2106 = vpop.f32.mrb[0].mxu0
        %v2107 = vadd.f32 0.0, %v2106
        %2108 = vmatprep.mubr.f32.mxu0 0.0
        %2109 = vmatmul.mubr.f32.gmra.mrb[0].mxu0 %v2006
        %v2110 = vpop.f32.mrb[0].mxu0
        %v2111 = vadd.f32 0.0, %v2110
        %v2112 = vpop.f32.mrb[0].mxu0
        %v2113 = vadd.f32 0.0, %v2112
        %2114 = vmatprep.mubr.f32.mxu0 0.0
        %2115 = vmatmul.mubr.f32.gmra.mrb[0].mxu0 %v2009
        %v2116 = vpop.f32.mrb[0].mxu0
        %v2117 = vadd.f32 0.0, %v2116
        %v2118 = vpop.f32.mrb[0].mxu0
        %v2119 = vadd.f32 0.0, %v2118
        %2120 = vmatprep.mubr.f32.mxu0 0.0
        %2121 = vmatmul.mubr.f32.gmra.mrb[0].mxu0 %v2012
        %v2122 = vpop.f32.mrb[0].mxu0
        %v2123 = vadd.f32 0.0, %v2122
        %v2124 = vpop.f32.mrb[0].mxu0
        %v2125 = vadd.f32 0.0, %v2124
        %2126 = vdwg.mxu0
        %2127 = vmatprep.subr.mxu0 %v1944
        %2128 = vmatpush1.msra.mxu0 %v1943
        %2129 = vmatprep.subr.mxu0 %v1949
        %2130 = vmatpush1.msra.mxu0 %v1948
        %2131 = vmatprep.subr.mxu0 %v1954
        %2132 = vmatpush1.msra.mxu0 %v1953
        %2133 = vmatprep.subr.mxu0 %v1959
        %2134 = vmatpush1.msra.mxu0 %v1958
        %2135 = vmatprep.subr.mxu0 %v1964
        %2136 = vmatpush1.msra.mxu0 %v1963
        %2137 = vmatprep.subr.mxu0 %v1969
        %2138 = vmatpush1.msra.mxu0 %v1968
        %2139 = vmatprep.subr.mxu0 %v1974
        %2140 = vmatpush1.msra.mxu0 %v1973
        %2141 = vmatprep.subr.mxu0 %v1979
        %2142 = vmatpush1.msra.mxu0 %v1978
        %2143 = vmatprep.subr.mxu0 0.0
        %2144 = vmatpush1.msra.mxu0 0.0
        %2145 = vmatprep.subr.mxu0 0.0
        %2146 = vmatpush1.msra.mxu0 0.0
        %2147 = vmatprep.subr.mxu0 0.0
        %2148 = vmatpush1.msra.mxu0 0.0
        %2149 = vmatprep.subr.mxu0 0.0
        %2150 = vmatpush1.msra.mxu0 0.0
        %2151 = vmatprep.subr.mxu0 0.0
        %2152 = vmatpush1.msra.mxu0 0.0
        %2153 = vmatprep.subr.mxu0 0.0
        %2154 = vmatpush1.msra.mxu0 0.0
        %2155 = vmatprep.subr.mxu0 0.0
        %2156 = vmatpush1.msra.mxu0 0.0
        %2157 = vmatprep.subr.mxu0 0.0
        %2158 = vmatpush1.msra.mxu0 0.0
        %2159 = vmatprep.subr.mxu0 0.0
        %2160 = vmatpush1.msra.mxu0 0.0
        %2161 = vmatprep.subr.mxu0 0.0
        %2162 = vmatpush1.msra.mxu0 0.0
        %2163 = vmatprep.subr.mxu0 0.0
        %2164 = vmatpush1.msra.mxu0 0.0
        %2165 = vmatprep.subr.mxu0 0.0
        %2166 = vmatpush1.msra.mxu0 0.0
        %2167 = vmatprep.subr.mxu0 0.0
        %2168 = vmatpush1.msra.mxu0 0.0
        %2169 = vmatprep.subr.mxu0 0.0
        %2170 = vmatpush1.msra.mxu0 0.0
        %2171 = vmatprep.subr.mxu0 0.0
        %2172 = vmatpush1.msra.mxu0 0.0
        %2173 = vmatprep.subr.mxu0 0.0
        %2174 = vmatpush1.msra.mxu0 0.0
        %2175 = vmatprep.subr.mxu0 0.0
        %2176 = vmatpush1.msra.mxu0 0.0
        %2177 = vmatprep.subr.mxu0 0.0
        %2178 = vmatpush1.msra.mxu0 0.0
        %2179 = vmatprep.subr.mxu0 0.0
        %2180 = vmatpush1.msra.mxu0 0.0
        %2181 = vmatprep.subr.mxu0 0.0
        %2182 = vmatpush1.msra.mxu0 0.0
        %2183 = vmatprep.subr.mxu0 0.0
        %2184 = vmatpush1.msra.mxu0 0.0
        %2185 = vmatprep.subr.mxu0 0.0
        %2186 = vmatpush1.msra.mxu0 0.0
        %2187 = vmatprep.subr.mxu0 0.0
        %2188 = vmatpush1.msra.mxu0 0.0
        %2189 = vmatprep.subr.mxu0 0.0
        %2190 = vmatpush1.msra.mxu0 0.0
        %2191 = vmatprep.mubr.f32.mxu0 0.0
        %2192 = vmatmul.mubr.f32.gmra.mrb[0].mxu0 %v1991
        %v2193 = vpop.f32.mrb[0].mxu0
        %v2194 = vadd.f32 0.0, %v2193
        %v2195 = vpop.f32.mrb[0].mxu0
        %v2196 = vadd.f32 0.0, %v2195
        %2197 = vmatprep.mubr.f32.mxu0 0.0
        %2198 = vmatmul.mubr.f32.gmra.mrb[0].mxu0 %v1994
        %v2199 = vpop.f32.mrb[0].mxu0
        %v2200 = vadd.f32 0.0, %v2199
        %v2201 = vpop.f32.mrb[0].mxu0
        %v2202 = vadd.f32 0.0, %v2201
        %2203 = vmatprep.mubr.f32.mxu0 0.0
        %2204 = vmatmul.mubr.f32.gmra.mrb[0].mxu0 %v1997
        %v2205 = vpop.f32.mrb[0].mxu0
        %v2206 = vadd.f32 0.0, %v2205
        %v2207 = vpop.f32.mrb[0].mxu0
        %v2208 = vadd.f32 0.0, %v2207
        %2209 = vmatprep.mubr.f32.mxu0 0.0
        %2210 = vmatmul.mubr.f32.gmra.mrb[0].mxu0 %v2000
        %v2211 = vpop.f32.mrb[0].mxu0
        %v2212 = vadd.f32 0.0, %v2211
        %v2213 = vpop.f32.mrb[0].mxu0
        %v2214 = vadd.f32 0.0, %v2213
        %2215 = vmatprep.mubr.f32.mxu0 0.0
        %2216 = vmatmul.mubr.f32.gmra.mrb[0].mxu0 %v2003
        %v2217 = vpop.f32.mrb[0].mxu0
        %v2218 = vadd.f32 0.0, %v2217
        %v2219 = vpop.f32.mrb[0].mxu0
        %v2220 = vadd.f32 0.0, %v2219
        %2221 = vmatprep.mubr.f32.mxu0 0.0
        %2222 = vmatmul.mubr.f32.gmra.mrb[0].mxu0 %v2006
        %v2223 = vpop.f32.mrb[0].mxu0
        %v2224 = vadd.f32 0.0, %v2223
        %v2225 = vpop.f32.mrb[0].mxu0
        %v2226 = vadd.f32 0.0, %v2225
        %2227 = vmatprep.mubr.f32.mxu0 0.0
        %2228 = vmatmul.mubr.f32.gmra.mrb[0].mxu0 %v2009
        %v2229 = vpop.f32.mrb[0].mxu0
        %v2230 = vadd.f32 0.0, %v2229
        %v2231 = vpop.f32.mrb[0].mxu0
        %v2232 = vadd.f32 0.0, %v2231
        %2233 = vmatprep.mubr.f32.mxu0 0.0
        %2234 = vmatmul.mubr.f32.gmra.mrb[0].mxu0 %v2012
        %v2235 = vpop.f32.mrb[0].mxu0
        %v2236 = vadd.f32 0.0, %v2235
        %v2237 = vpop.f32.mrb[0].mxu0
        %v2238 = vadd.f32 0.0, %v2237
        %2239 = vdwg.mxu0
        %2240 = vmatprep.subr.mxu0 0.0
        %2241 = vmatpush1.msra.mxu0 %v1945
        %2242 = vmatprep.subr.mxu0 0.0
        %2243 = vmatpush1.msra.mxu0 %v1950
        %2244 = vmatprep.subr.mxu0 0.0
        %2245 = vmatpush1.msra.mxu0 %v1955
        %2246 = vmatprep.subr.mxu0 0.0
        %2247 = vmatpush1.msra.mxu0 %v1960
        %2248 = vmatprep.subr.mxu0 0.0
        %2249 = vmatpush1.msra.mxu0 %v1965
        %2250 = vmatprep.subr.mxu0 0.0
        %2251 = vmatpush1.msra.mxu0 %v1970
        %2252 = vmatprep.subr.mxu0 0.0
        %2253 = vmatpush1.msra.mxu0 %v1975
        %2254 = vmatprep.subr.mxu0 0.0
        %2255 = vmatpush1.msra.mxu0 %v1980
        %2256 = vmatprep.subr.mxu0 0.0
        %2257 = vmatpush1.msra.mxu0 0.0
        %2258 = vmatprep.subr.mxu0 0.0
        %2259 = vmatpush1.msra.mxu0 0.0
        %2260 = vmatprep.subr.mxu0 0.0
        %2261 = vmatpush1.msra.mxu0 0.0
        %2262 = vmatprep.subr.mxu0 0.0
        %2263 = vmatpush1.msra.mxu0 0.0
        %2264 = vmatprep.subr.mxu0 0.0
        %2265 = vmatpush1.msra.mxu0 0.0
        %2266 = vmatprep.subr.mxu0 0.0
        %2267 = vmatpush1.msra.mxu0 0.0
        %2268 = vmatprep.subr.mxu0 0.0
        %2269 = vmatpush1.msra.mxu0 0.0
        %2270 = vmatprep.subr.mxu0 0.0
        %2271 = vmatpush1.msra.mxu0 0.0
        %2272 = vmatprep.subr.mxu0 0.0
        %2273 = vmatpush1.msra.mxu0 0.0
        %2274 = vmatprep.subr.mxu0 0.0
        %2275 = vmatpush1.msra.mxu0 0.0
        %2276 = vmatprep.subr.mxu0 0.0
        %2277 = vmatpush1.msra.mxu0 0.0
        %2278 = vmatprep.subr.mxu0 0.0
        %2279 = vmatpush1.msra.mxu0 0.0
        %2280 = vmatprep.subr.mxu0 0.0
        %2281 = vmatpush1.msra.mxu0 0.0
        %2282 = vmatprep.subr.mxu0 0.0
        %2283 = vmatpush1.msra.mxu0 0.0
        %2284 = vmatprep.subr.mxu0 0.0
        %2285 = vmatpush1.msra.mxu0 0.0
        %2286 = vmatprep.subr.mxu0 0.0
        %2287 = vmatpush1.msra.mxu0 0.0
        %2288 = vmatprep.subr.mxu0 0.0
        %2289 = vmatpush1.msra.mxu0 0.0
        %2290 = vmatprep.subr.mxu0 0.0
        %2291 = vmatpush1.msra.mxu0 0.0
        %2292 = vmatprep.subr.mxu0 0.0
        %2293 = vmatpush1.msra.mxu0 0.0
        %2294 = vmatprep.subr.mxu0 0.0
        %2295 = vmatpush1.msra.mxu0 0.0
        %2296 = vmatprep.subr.mxu0 0.0
        %2297 = vmatpush1.msra.mxu0 0.0
        %2298 = vmatprep.subr.mxu0 0.0
        %2299 = vmatpush1.msra.mxu0 0.0
        %2300 = vmatprep.subr.mxu0 0.0
        %2301 = vmatpush1.msra.mxu0 0.0
        %2302 = vmatprep.subr.mxu0 0.0
        %2303 = vmatpush1.msra.mxu0 0.0
        %2304 = vmatprep.mubr.f32.mxu0 0.0
        %2305 = vmatmul.mubr.f32.gmra.mrb[0].mxu0 %v1991
        %v2306 = vpop.f32.mrb[0].mxu0
        %v2307 = vadd.f32 0.0, %v2306
        %v2308 = vpop.f32.mrb[0].mxu0
        %2309 = vmatprep.mubr.f32.mxu0 0.0
        %2310 = vmatmul.mubr.f32.gmra.mrb[0].mxu0 %v1994
        %v2311 = vpop.f32.mrb[0].mxu0
        %v2312 = vadd.f32 0.0, %v2311
        %v2313 = vpop.f32.mrb[0].mxu0
        %2314 = vmatprep.mubr.f32.mxu0 0.0
        %2315 = vmatmul.mubr.f32.gmra.mrb[0].mxu0 %v1997
        %v2316 = vpop.f32.mrb[0].mxu0
        %v2317 = vadd.f32 0.0, %v2316
        %v2318 = vpop.f32.mrb[0].mxu0
        %2319 = vmatprep.mubr.f32.mxu0 0.0
        %2320 = vmatmul.mubr.f32.gmra.mrb[0].mxu0 %v2000
        %v2321 = vpop.f32.mrb[0].mxu0
        %v2322 = vadd.f32 0.0, %v2321
        %v2323 = vpop.f32.mrb[0].mxu0
        %2324 = vmatprep.mubr.f32.mxu0 0.0
        %2325 = vmatmul.mubr.f32.gmra.mrb[0].mxu0 %v2003
        %v2326 = vpop.f32.mrb[0].mxu0
        %v2327 = vadd.f32 0.0, %v2326
        %v2328 = vpop.f32.mrb[0].mxu0
        %2329 = vmatprep.mubr.f32.mxu0 0.0
        %2330 = vmatmul.mubr.f32.gmra.mrb[0].mxu0 %v2006
        %v2331 = vpop.f32.mrb[0].mxu0
        %v2332 = vadd.f32 0.0, %v2331
        %v2333 = vpop.f32.mrb[0].mxu0
        %2334 = vmatprep.mubr.f32.mxu0 0.0
        %2335 = vmatmul.mubr.f32.gmra.mrb[0].mxu0 %v2009
        %v2336 = vpop.f32.mrb[0].mxu0
        %v2337 = vadd.f32 0.0, %v2336
        %v2338 = vpop.f32.mrb[0].mxu0
        %2339 = vmatprep.mubr.f32.mxu0 0.0
        %2340 = vmatmul.mubr.f32.gmra.mrb[0].mxu0 %v2012
        %v2341 = vpop.f32.mrb[0].mxu0
        %v2342 = vadd.f32 0.0, %v2341
        %v2343 = vpop.f32.mrb[0].mxu0
        %2344 = vdwg.mxu0
        %v2345 = vmax.f32 %v2081, 0.0
        %v2346 = vmax.f32 %v2083, 0.0
        %v2347 = vmax.f32 %v2194, 0.0
        %v2348 = vmax.f32 %v2196, 0.0
        %v2349 = vmax.f32 %v2307, 0.0
        %v2350 = vmax.f32 %v2087, 0.0
        %v2351 = vmax.f32 %v2089, 0.0
        %v2352 = vmax.f32 %v2200, 0.0
        %v2353 = vmax.f32 %v2202, 0.0
        %v2354 = vmax.f32 %v2312, 0.0
        %v2355 = vmax.f32 %v2093, 0.0
        %v2356 = vmax.f32 %v2095, 0.0
        %v2357 = vmax.f32 %v2206, 0.0
        %v2358 = vmax.f32 %v2208, 0.0
        %v2359 = vmax.f32 %v2317, 0.0
        %v2360 = vmax.f32 %v2099, 0.0
        %v2361 = vmax.f32 %v2101, 0.0
        %v2362 = vmax.f32 %v2212, 0.0
        %v2363 = vmax.f32 %v2214, 0.0
        %v2364 = vmax.f32 %v2322, 0.0
        %v2365 = vmax.f32 %v2105, 0.0
        %v2366 = vmax.f32 %v2107, 0.0
        %v2367 = vmax.f32 %v2218, 0.0
        %v2368 = vmax.f32 %v2220, 0.0
        %v2369 = vmax.f32 %v2327, 0.0
        %v2370 = vmax.f32 %v2111, 0.0
        %v2371 = vmax.f32 %v2113, 0.0
        %v2372 = vmax.f32 %v2224, 0.0
        %v2373 = vmax.f32 %v2226, 0.0
        %v2374 = vmax.f32 %v2332, 0.0
        %v2375 = vmax.f32 %v2117, 0.0
        %v2376 = vmax.f32 %v2119, 0.0
        %v2377 = vmax.f32 %v2230, 0.0
        %v2378 = vmax.f32 %v2232, 0.0
        %v2379 = vmax.f32 %v2337, 0.0
        %v2380 = vmax.f32 %v2123, 0.0
        %v2381 = vmax.f32 %v2125, 0.0
        %v2382 = vmax.f32 %v2236, 0.0
        %v2383 = vmax.f32 %v2238, 0.0
        %v2384 = vmax.f32 %v2342, 0.0
        %v2385 = vld [vmem:[%s4] sm:$0x7]
        %v2387 = vsel %vm1989, %v2385, 0
        %2389 = vmatprep.subr.mxu0 %v2346
        %2390 = vmatpush1.msra.mxu0 %v2345
        %2391 = vmatprep.subr.mxu0 %v2351
        %2392 = vmatpush1.msra.mxu0 %v2350
        %2393 = vmatprep.subr.mxu0 %v2356
        %2394 = vmatpush1.msra.mxu0 %v2355
        %2395 = vmatprep.subr.mxu0 %v2361
        %2396 = vmatpush1.msra.mxu0 %v2360
        %2397 = vmatprep.subr.mxu0 %v2366
        %2398 = vmatpush1.msra.mxu0 %v2365
        %2399 = vmatprep.subr.mxu0 %v2371
        %2400 = vmatpush1.msra.mxu0 %v2370
        %2401 = vmatprep.subr.mxu0 %v2376
        %2402 = vmatpush1.msra.mxu0 %v2375
        %2403 = vmatprep.subr.mxu0 %v2381
        %2404 = vmatpush1.msra.mxu0 %v2380
        %2405 = vmatprep.subr.mxu0 0.0
        %2406 = vmatpush1.msra.mxu0 0.0
        %2407 = vmatprep.subr.mxu0 0.0
        %2408 = vmatpush1.msra.mxu0 0.0
        %2409 = vmatprep.subr.mxu0 0.0
        %2410 = vmatpush1.msra.mxu0 0.0
        %2411 = vmatprep.subr.mxu0 0.0
        %2412 = vmatpush1.msra.mxu0 0.0
        %2413 = vmatprep.subr.mxu0 0.0
        %2414 = vmatpush1.msra.mxu0 0.0
        %2415 = vmatprep.subr.mxu0 0.0
        %2416 = vmatpush1.msra.mxu0 0.0
        %2417 = vmatprep.subr.mxu0 0.0
        %2418 = vmatpush1.msra.mxu0 0.0
        %2419 = vmatprep.subr.mxu0 0.0
        %2420 = vmatpush1.msra.mxu0 0.0
        %2421 = vmatprep.subr.mxu0 0.0
        %2422 = vmatpush1.msra.mxu0 0.0
        %2423 = vmatprep.subr.mxu0 0.0
        %2424 = vmatpush1.msra.mxu0 0.0
        %2425 = vmatprep.subr.mxu0 0.0
        %2426 = vmatpush1.msra.mxu0 0.0
        %2427 = vmatprep.subr.mxu0 0.0
        %2428 = vmatpush1.msra.mxu0 0.0
        %2429 = vmatprep.subr.mxu0 0.0
        %2430 = vmatpush1.msra.mxu0 0.0
        %2431 = vmatprep.subr.mxu0 0.0
        %2432 = vmatpush1.msra.mxu0 0.0
        %2433 = vmatprep.subr.mxu0 0.0
        %2434 = vmatpush1.msra.mxu0 0.0
        %2435 = vmatprep.subr.mxu0 0.0
        %2436 = vmatpush1.msra.mxu0 0.0
        %2437 = vmatprep.subr.mxu0 0.0
        %2438 = vmatpush1.msra.mxu0 0.0
        %2439 = vmatprep.subr.mxu0 0.0
        %2440 = vmatpush1.msra.mxu0 0.0
        %2441 = vmatprep.subr.mxu0 0.0
        %2442 = vmatpush1.msra.mxu0 0.0
        %2443 = vmatprep.subr.mxu0 0.0
        %2444 = vmatpush1.msra.mxu0 0.0
        %2445 = vmatprep.subr.mxu0 0.0
        %2446 = vmatpush1.msra.mxu0 0.0
        %2447 = vmatprep.subr.mxu0 0.0
        %2448 = vmatpush1.msra.mxu0 0.0
        %2449 = vmatprep.subr.mxu0 0.0
        %2450 = vmatpush1.msra.mxu0 0.0
        %2451 = vmatprep.subr.mxu0 0.0
        %2452 = vmatpush1.msra.mxu0 0.0
        %2453 = vmatprep.mubr.f32.mxu0 0.0
        %2454 = vmatmul.mubr.f32.gmra.mrb[0].mxu0 %v2387
        %v2455 = vpop.f32.mrb[0].mxu0
        %v2456 = vadd.f32 0.0, %v2455
        %v2457 = vpop.f32.mrb[0].mxu0
        %v2458 = vadd.f32 0.0, %v2457
        %2459 = vdwg.mxu0
        %2460 = vmatprep.subr.mxu0 %v2348
        %2461 = vmatpush1.msra.mxu0 %v2347
        %2462 = vmatprep.subr.mxu0 %v2353
        %2463 = vmatpush1.msra.mxu0 %v2352
        %2464 = vmatprep.subr.mxu0 %v2358
        %2465 = vmatpush1.msra.mxu0 %v2357
        %2466 = vmatprep.subr.mxu0 %v2363
        %2467 = vmatpush1.msra.mxu0 %v2362
        %2468 = vmatprep.subr.mxu0 %v2368
        %2469 = vmatpush1.msra.mxu0 %v2367
        %2470 = vmatprep.subr.mxu0 %v2373
        %2471 = vmatpush1.msra.mxu0 %v2372
        %2472 = vmatprep.subr.mxu0 %v2378
        %2473 = vmatpush1.msra.mxu0 %v2377
        %2474 = vmatprep.subr.mxu0 %v2383
        %2475 = vmatpush1.msra.mxu0 %v2382
        %2476 = vmatprep.subr.mxu0 0.0
        %2477 = vmatpush1.msra.mxu0 0.0
        %2478 = vmatprep.subr.mxu0 0.0
        %2479 = vmatpush1.msra.mxu0 0.0
        %2480 = vmatprep.subr.mxu0 0.0
        %2481 = vmatpush1.msra.mxu0 0.0
        %2482 = vmatprep.subr.mxu0 0.0
        %2483 = vmatpush1.msra.mxu0 0.0
        %2484 = vmatprep.subr.mxu0 0.0
        %2485 = vmatpush1.msra.mxu0 0.0
        %2486 = vmatprep.subr.mxu0 0.0
        %2487 = vmatpush1.msra.mxu0 0.0
        %2488 = vmatprep.subr.mxu0 0.0
        %2489 = vmatpush1.msra.mxu0 0.0
        %2490 = vmatprep.subr.mxu0 0.0
        %2491 = vmatpush1.msra.mxu0 0.0
        %2492 = vmatprep.subr.mxu0 0.0
        %2493 = vmatpush1.msra.mxu0 0.0
        %2494 = vmatprep.subr.mxu0 0.0
        %2495 = vmatpush1.msra.mxu0 0.0
        %2496 = vmatprep.subr.mxu0 0.0
        %2497 = vmatpush1.msra.mxu0 0.0
        %2498 = vmatprep.subr.mxu0 0.0
        %2499 = vmatpush1.msra.mxu0 0.0
        %2500 = vmatprep.subr.mxu0 0.0
        %2501 = vmatpush1.msra.mxu0 0.0
        %2502 = vmatprep.subr.mxu0 0.0
        %2503 = vmatpush1.msra.mxu0 0.0
        %2504 = vmatprep.subr.mxu0 0.0
        %2505 = vmatpush1.msra.mxu0 0.0
        %2506 = vmatprep.subr.mxu0 0.0
        %2507 = vmatpush1.msra.mxu0 0.0
        %2508 = vmatprep.subr.mxu0 0.0
        %2509 = vmatpush1.msra.mxu0 0.0
        %2510 = vmatprep.subr.mxu0 0.0
        %2511 = vmatpush1.msra.mxu0 0.0
        %2512 = vmatprep.subr.mxu0 0.0
        %2513 = vmatpush1.msra.mxu0 0.0
        %2514 = vmatprep.subr.mxu0 0.0
        %2515 = vmatpush1.msra.mxu0 0.0
        %2516 = vmatprep.subr.mxu0 0.0
        %2517 = vmatpush1.msra.mxu0 0.0
        %2518 = vmatprep.subr.mxu0 0.0
        %2519 = vmatpush1.msra.mxu0 0.0
        %2520 = vmatprep.subr.mxu0 0.0
        %2521 = vmatpush1.msra.mxu0 0.0
        %2522 = vmatprep.subr.mxu0 0.0
        %2523 = vmatpush1.msra.mxu0 0.0
        %2524 = vmatprep.mubr.f32.mxu0 0.0
        %2525 = vmatmul.mubr.f32.gmra.mrb[0].mxu0 %v2387
        %v2526 = vpop.f32.mrb[0].mxu0
        %v2527 = vadd.f32 0.0, %v2526
        %v2528 = vpop.f32.mrb[0].mxu0
        %v2529 = vadd.f32 0.0, %v2528
        %2530 = vdwg.mxu0
        %2531 = vmatprep.subr.mxu0 0.0
        %2532 = vmatpush1.msra.mxu0 %v2349
        %2533 = vmatprep.subr.mxu0 0.0
        %2534 = vmatpush1.msra.mxu0 %v2354
        %2535 = vmatprep.subr.mxu0 0.0
        %2536 = vmatpush1.msra.mxu0 %v2359
        %2537 = vmatprep.subr.mxu0 0.0
        %2538 = vmatpush1.msra.mxu0 %v2364
        %2539 = vmatprep.subr.mxu0 0.0
        %2540 = vmatpush1.msra.mxu0 %v2369
        %2541 = vmatprep.subr.mxu0 0.0
        %2542 = vmatpush1.msra.mxu0 %v2374
        %2543 = vmatprep.subr.mxu0 0.0
        %2544 = vmatpush1.msra.mxu0 %v2379
        %2545 = vmatprep.subr.mxu0 0.0
        %2546 = vmatpush1.msra.mxu0 %v2384
        %2547 = vmatprep.subr.mxu0 0.0
        %2548 = vmatpush1.msra.mxu0 0.0
        %2549 = vmatprep.subr.mxu0 0.0
        %2550 = vmatpush1.msra.mxu0 0.0
        %2551 = vmatprep.subr.mxu0 0.0
        %2552 = vmatpush1.msra.mxu0 0.0
        %2553 = vmatprep.subr.mxu0 0.0
        %2554 = vmatpush1.msra.mxu0 0.0
        %2555 = vmatprep.subr.mxu0 0.0
        %2556 = vmatpush1.msra.mxu0 0.0
        %2557 = vmatprep.subr.mxu0 0.0
        %2558 = vmatpush1.msra.mxu0 0.0
        %2559 = vmatprep.subr.mxu0 0.0
        %2560 = vmatpush1.msra.mxu0 0.0
        %2561 = vmatprep.subr.mxu0 0.0
        %2562 = vmatpush1.msra.mxu0 0.0
        %2563 = vmatprep.subr.mxu0 0.0
        %2564 = vmatpush1.msra.mxu0 0.0
        %2565 = vmatprep.subr.mxu0 0.0
        %2566 = vmatpush1.msra.mxu0 0.0
        %2567 = vmatprep.subr.mxu0 0.0
        %2568 = vmatpush1.msra.mxu0 0.0
        %2569 = vmatprep.subr.mxu0 0.0
        %2570 = vmatpush1.msra.mxu0 0.0
        %2571 = vmatprep.subr.mxu0 0.0
        %2572 = vmatpush1.msra.mxu0 0.0
        %2573 = vmatprep.subr.mxu0 0.0
        %2574 = vmatpush1.msra.mxu0 0.0
        %2575 = vmatprep.subr.mxu0 0.0
        %2576 = vmatpush1.msra.mxu0 0.0
        %2577 = vmatprep.subr.mxu0 0.0
        %2578 = vmatpush1.msra.mxu0 0.0
        %2579 = vmatprep.subr.mxu0 0.0
        %2580 = vmatpush1.msra.mxu0 0.0
        %2581 = vmatprep.subr.mxu0 0.0
        %2582 = vmatpush1.msra.mxu0 0.0
        %2583 = vmatprep.subr.mxu0 0.0
        %2584 = vmatpush1.msra.mxu0 0.0
        %2585 = vmatprep.subr.mxu0 0.0
        %2586 = vmatpush1.msra.mxu0 0.0
        %2587 = vmatprep.subr.mxu0 0.0
        %2588 = vmatpush1.msra.mxu0 0.0
        %2589 = vmatprep.subr.mxu0 0.0
        %2590 = vmatpush1.msra.mxu0 0.0
        %2591 = vmatprep.subr.mxu0 0.0
        %2592 = vmatpush1.msra.mxu0 0.0
        %2593 = vmatprep.subr.mxu0 0.0
        %2594 = vmatpush1.msra.mxu0 0.0
        %2595 = vmatprep.mubr.f32.mxu0 0.0
        %2596 = vmatmul.mubr.f32.gmra.mrb[0].mxu0 %v2387
        %v2597 = vpop.f32.mrb[0].mxu0
        %v2598 = vadd.f32 0.0, %v2597
        %v2599 = vpop.f32.mrb[0].mxu0
        %2600 = vdwg.mxu0
        %v2601 = vmul.f32 %v1866, 0.00390625
        %v2602 = vmul.f32 %v1867, 0.00390625
        %v2603 = vmul.f32 %v1868, 0.00390625
        %v2604 = vmul.f32 %v1869, 0.00390625
        %v2605 = vmul.f32 %v1870, 0.00390625
        %v2611 = vrot.slane %v2601, 5
        %v2612 = vrot.slane %v2602, 5
        %v2613 = vrot.slane %v2603, 5
        %v2614 = vrot.slane %v2604, 5
        %v2615 = vrot.slane %v2605, 5
        %vm2621 = vcmask 1042432
        %v2622 = vsel %vm2621, %v2456, %v2611
        %v2623 = vsel %vm2621, %v2458, %v2612
        %v2624 = vsel %vm2621, %v2527, %v2613
        %v2625 = vsel %vm2621, %v2529, %v2614
        %v2626 = vsel %vm2621, %v2598, %v2615
        %v2631 = vcombine.low %v2622, %v2623
        %v2632 = vcombine.low %v2624, %v2625
        %2635 = vst [vmem:[%s218] sm:$0xff] %v2631
        %2636 = vst [vmem:[%s218 + $0x8] sm:$0xff] %v2632
        %2637 = vst [vmem:[%s218 + $0x10] sm:$0xf] %v2626
        %s2638 = sand.u32 %s137, 1
        %s2639 = scalar_lea.sflag [#allocation4], %s2638
        %s2640 = sand.u32 %s137, 1
        %s2641 = smul.addr %s2640, 20
        %s2642 = scalar_lea.vmem [#allocation3], %s2641
        // Predicated region
        $region41: #{tpu_custom_call.1} parent=39 // pred_check
          %p2643 = pneg %p147
        $region42: #{tpu_custom_call.1} parent=39 // pred_check_branch
          %2645 = sbr.rel (%p2643) target = $region44
        $region43: #{tpu_custom_call.1} parent=39 // pred_region
          %s2646 = smul.u32 5, %s19
          %s2648 = ssub.s32 320, 320
          %2649 = vsyncadd %s2639, %s2648
          %s2650 = smul.addr %s2646, 64
          %s2651 = scalar_lea.hbm %s5, %s2650
          %s2653 = sshll.u32 %s2642, 4
          %s2654 = int_to_ptr.vmem [resolvable:$true] %s2653
          %2656 = dma.vmem_to_hbm [thread:$0]  %s2654, 320, %s2651, %s2639
        $region44: #{tpu_custom_call.1} parent=39 // pred_fallthru
          _
      $region40: #{tpu_custom_call.1} parent=5 // pred_fallthru
        _
      %p2657 = scmp.le.s32.totalorder 2, %s14
      // Predicated region
      $region45: #{tpu_custom_call.1} parent=5 // pred_check
        %p2658 = pneg %p2657
      $region46: #{tpu_custom_call.1} parent=5 // pred_check_branch
        %2660 = sbr.rel (%p2658) target = $region48
      $region47: #{tpu_custom_call.1} parent=5 // pred_region
        %s2661 = ssub.s32 %s14, 2
        // Predicated region
        $region49: #{tpu_custom_call.1} parent=47 // pred_check
          %p2662 = pneg %p153
        $region50: #{tpu_custom_call.1} parent=47 // pred_check_branch
          %2664 = sbr.rel (%p2662) target = $region52
        $region51: #{tpu_custom_call.1} parent=47 // pred_region
          %s2665 = sand.u32 %s138, 1
          %s2666 = scalar_lea.sflag [#allocation4], %s2665
          %s2667 = sand.u32 %s138, 1
          %s2668 = smul.addr %s2667, 20
          %s2669 = scalar_lea.vmem [#allocation3], %s2668
          %2670 = dma.done %s2666, 320
        $region52: #{tpu_custom_call.1} parent=47 // pred_fallthru
          _
      $region48: #{tpu_custom_call.1} parent=5 // pred_fallthru
        _
    $region6: #{tpu_custom_call.1} parent=1 // loop_footer
      %s18 = sadd.s32 1, %s14
    $region7: #{tpu_custom_call.1} parent=1 // loop_footer_branch
      %13 = sbr.rel target = $region3
    $region8: #{tpu_custom_call.1} parent=1 // loop_exit
      _
    %2671 = vsyncpa [#allocation4], 1
    %s2672 = scalar_lea.sflag [#allocation4], 1
    %2673 = vsyncpa %s2672, 1

</llo_original>
